<compile_context>
chip_gen: v7x
topology: tpu7x:2x2x1
jax: 0.10.0
libtpu: 0.0.40
codegen_flags: <defaults>
</compile_context>

<pallas_src>
import jax
import jax.numpy as jnp
import numpy as np
from jax.experimental import pallas as pl
from jax.experimental.pallas import tpu as pltpu


def _sigmoid(x):
    # sigmoid(x) == 0.5 * tanh(0.5 * x) + 0.5: one EUP tanh per vreg plus two
    # cheap VPU ops; avoids exp + (1 + e) + divide on the single EUP slot.
    return 0.5 * jnp.tanh(0.5 * x) + 0.5


def _din_kernel(q_ref, ub_ref, mask_ref,
                wq_ref, wub_ref, b1_ref,
                w2_ref, b2_ref, w3t_ref, b3_ref,
                out_ref):
    f32 = jnp.float32
    q = q_ref[...]                      # (TB, 2D)    compute dtype
    ub = ub_ref[...]                    # (TB, L, 2D) compute dtype
    m = mask_ref[...]                   # (TB, L)     f32

    TB, L, D2 = ub.shape

    # Per-behavior fc1 features: [ub, q*ub]  (query-only terms folded into wq).
    # Implicit broadcast of q over L; no materialized (TB, L, 2D) qb / qb-ub.
    qub = q[:, None, :] * ub                                     # (TB, L, 2D)
    x = jnp.concatenate([ub.reshape(TB * L, D2),
                         qub.reshape(TB * L, D2)], axis=-1)      # (TB*L, 4D)

    # fc1: one (TB,2D)@(2D,H1) per-row matmul + one (TB*L,4D)@(4D,H1) matmul.
    hq = jnp.dot(q, wq_ref[...], preferred_element_type=f32)     # (TB, H1)
    hq = hq + b1_ref[...]                # fold fc1 bias into the per-row term
    h1 = jnp.dot(x, wub_ref[...], preferred_element_type=f32)    # (TB*L, H1)
    H1 = h1.shape[-1]
    h1 = _sigmoid(h1.reshape(TB, L, H1) + hq[:, None, :])        # (TB, L, H1) f32

    # fc2 (flattened M = TB*L keeps the MXU full).
    h2 = jnp.dot(h1.reshape(TB * L, H1).astype(w2_ref.dtype), w2_ref[...],
                 preferred_element_type=f32)                     # (TB*L, H2)
    H2 = h2.shape[-1]
    h2 = _sigmoid(h2.reshape(TB, L, H2) + b2_ref[...])           # (TB, L, H2)

    # fc3: 1-wide output -> VPU multiply + XLU lane reduce (no 1-lane MXU pop).
    s = jnp.sum(h2 * w3t_ref[...], axis=-1) + b3_ref[...]        # (TB, L)

    neg = jnp.float32(-2.0 ** 32 + 1)
    s = jnp.where(m != 0, s, neg)

    # softmax over L (f32)
    s = s - jnp.max(s, axis=1, keepdims=True)
    e = jnp.exp(s)
    l = jnp.sum(e, axis=1, keepdims=True)                        # (TB, 1)
    # EUP approximate reciprocal + one Newton step: EUP slot is free here and
    # the polish (2 VPU ops on a (TB,1) tensor) restores ~f32 accuracy.
    r = pl.reciprocal(l, approx=True)
    r = r * (2.0 - l * r)
    p = e * r                                                    # (TB, L)

    # weighted sum of behaviors (f32 accumulate)
    out_ref[...] = jnp.sum(p[:, :, None] * ub.astype(f32),
                           axis=1).astype(out_ref.dtype)         # (TB, 2D)


def din_attention(queries, user_behaviors, masks, params, *,
                  block_b=512, compute_dtype=jnp.float32):
    """Pallas implementation of UserEmbeddingAttentionLayer.forward."""
    w1, b1, w2, b2, w3, b3 = params
    B, D2 = queries.shape
    _, L, _ = user_behaviors.shape

    # ---- JAX glue: fold the query-only fc1 terms out of the L dimension ----
    # concat([q,ub,q-ub,q*ub]) @ W1
    #   == q @ (W1q + W1d) + ub @ (W1u - W1d) + (q*ub) @ W1p
    w1q, w1u, w1d, w1p = jnp.split(w1, 4, axis=0)                # each (2D, H1)
    wq = (w1q + w1d).astype(compute_dtype)                       # (2D, H1)
    wub = jnp.concatenate([w1u - w1d, w1p], axis=0).astype(compute_dtype)  # (4D, H1)
    w2c = w2.astype(compute_dtype)                               # (H1, H2)
    w3t = jnp.asarray(w3.T, jnp.float32)                         # (1, H2) (VPU path)
    b1f = jnp.asarray(b1, jnp.float32)                           # (1, H1)
    b2f = jnp.asarray(b2, jnp.float32)                           # (1, H2)
    b3f = jnp.asarray(b3, jnp.float32)                           # (1, 1)

    q = queries.astype(compute_dtype)
    ub = user_behaviors.astype(compute_dtype)
    m = masks.astype(jnp.float32)

    # Batch tile: biggest reasonable multiple of 8 (sublane) that fits easily
    # in scoped VMEM (tiles here are small: TB*L*2D*4B ~ 0.5 MiB at TB=512, so
    # the default vmem_limit_bytes is plenty; no need to raise it).
    TB = min(block_b, B)
    if TB < B:
        TB = max(8, (TB // 8) * 8)
    grid = (pl.cdiv(B, TB),)

    const2 = lambda i: (0, 0)
    in_specs = [
        pl.BlockSpec((TB, D2), lambda i: (i, 0)),        # queries tile
        pl.BlockSpec((TB, L, D2), lambda i: (i, 0, 0)),  # behaviors tile
        pl.BlockSpec((TB, L), lambda i: (i, 0)),         # mask tile
        pl.BlockSpec(wq.shape, const2),                  # weights: resident
        pl.BlockSpec(wub.shape, const2),
        pl.BlockSpec(b1f.shape, const2),
        pl.BlockSpec(w2c.shape, const2),
        pl.BlockSpec(b2f.shape, const2),
        pl.BlockSpec(w3t.shape, const2),
        pl.BlockSpec(b3f.shape, const2),
    ]
    out_specs = pl.BlockSpec((TB, D2), lambda i: (i, 0))

    return pl.pallas_call(
        _din_kernel,
        out_shape=jax.ShapeDtypeStruct((B, D2), jnp.float32),
        grid=grid,
        in_specs=in_specs,
        out_specs=out_specs,
        compiler_params=pltpu.CompilerParams(
            dimension_semantics=("parallel",)),
    )(q, ub, m, wq, wub, b1f, w2c, b2f, w3t, b3f)


def din_attention_ref(queries, user_behaviors, masks, params):
    """Pure-JAX reference mirroring the PyTorch module exactly."""
    w1, b1, w2, b2, w3, b3 = params
    B, L, D2 = user_behaviors.shape
    qb = jnp.broadcast_to(queries[:, None, :], (B, L, D2))
    feat = jnp.concatenate(
        [qb, user_behaviors, qb - user_behaviors, qb * user_behaviors], axis=2)
    x = feat.reshape(-1, 4 * D2)
    x = jax.nn.sigmoid(x @ w1 + b1[0])
    x = jax.nn.sigmoid(x @ w2 + b2[0])
    x = x @ w3 + b3[0]
    s = x.reshape(B, L, 1)
    neg = jnp.full_like(s, -2.0 ** 32 + 1)
    s = jnp.where(masks[..., None] != 0, s, neg)
    s = jax.nn.softmax(s, axis=1)
    return jnp.sum(s * user_behaviors, axis=1)


def init_params(key, embedding_dim, hidden_size=(80, 40)):
    """Deterministic synthetic parameters (PyTorch Linear shapes, transposed)."""
    d8 = embedding_dim * 8
    h1, h2 = hidden_size
    ks = jax.random.split(key, 6)
    # store weights as (in, out); biases as (1, out) for clean 2D VMEM layout
    w1 = jax.random.uniform(ks[0], (d8, h1), jnp.float32, -1, 1) / np.sqrt(d8)
    b1 = jax.random.uniform(ks[1], (1, h1), jnp.float32, -1, 1) / np.sqrt(d8)
    w2 = jax.random.uniform(ks[2], (h1, h2), jnp.float32, -1, 1) / np.sqrt(h1)
    b2 = jax.random.uniform(ks[3], (1, h2), jnp.float32, -1, 1) / np.sqrt(h1)
    w3 = jax.random.uniform(ks[4], (h2, 1), jnp.float32, -1, 1) / np.sqrt(h2)
    b3 = jax.random.uniform(ks[5], (1, 1), jnp.float32, -1, 1) / np.sqrt(h2)
    return (w1, b1, w2, b2, w3, b3)


if __name__ == "__main__":
    key = jax.random.PRNGKey(0)
    k_q, k_ub, k_m, k_p = jax.random.split(key, 4)

    embedding_dim = 16          # D  -> 2D = 32 features, fc1 in = 128
    B, L, D2 = 16, 8, 2 * embedding_dim

    queries = jax.random.normal(k_q, (B, D2), jnp.float32)
    user_behaviors = jax.random.normal(k_ub, (B, L, D2), jnp.float32)
    masks = (jax.random.uniform(k_m, (B, L)) > 0.3).astype(jnp.float32)
    masks = masks.at[:, 0].set(1.0)   # ensure at least one valid behavior per row

    params = init_params(k_p, embedding_dim)
    ref = din_attention_ref(queries, user_behaviors, masks, params)

    # f32 path; block_b=8 forces grid=(2,) so tiling/pipelining is exercised.
    out = din_attention(queries, user_behaviors, masks, params, block_b=8)
    out = jax.block_until_ready(out)
    # Tolerance reflects the EUP approx-reciprocal (+Newton polish), the
    # tanh-form sigmoid and the algebraic fc1 weight folding (reassociation),
    # not any bf16 truncation.
    np.testing.assert_allclose(np.asarray(out), np.asarray(ref),
                               rtol=1e-4, atol=2e-4)

    # bf16 matmul-input path (f32 accumulation); looser tolerance.
    out_bf16 = din_attention(queries, user_behaviors, masks, params,
                             block_b=8, compute_dtype=jnp.bfloat16)
    out_bf16 = jax.block_until_ready(out_bf16)
    np.testing.assert_allclose(np.asarray(out_bf16), np.asarray(ref),
                               rtol=5e-2, atol=5e-2)

    print("KERNEL_OK")
</pallas_src>

<mosaic_0001>
module attributes {stable_mosaic.version = 11 : i64} {
  func.func @_din_kernel(%arg0: i32, %arg1: memref<8x32xf32, #tpu.memory_space<vmem>>, %arg2: memref<8x8x32xf32, #tpu.memory_space<vmem>>, %arg3: memref<8x8xf32, #tpu.memory_space<vmem>>, %arg4: memref<32x80xf32, #tpu.memory_space<vmem>>, %arg5: memref<64x80xf32, #tpu.memory_space<vmem>>, %arg6: memref<1x80xf32, #tpu.memory_space<vmem>>, %arg7: memref<80x40xf32, #tpu.memory_space<vmem>>, %arg8: memref<1x40xf32, #tpu.memory_space<vmem>>, %arg9: memref<1x40xf32, #tpu.memory_space<vmem>>, %arg10: memref<1x1xf32, #tpu.memory_space<vmem>>, %arg11: memref<8x32xf32, #tpu.memory_space<vmem>>) attributes {dimension_semantics = [#tpu.dimension_semantics<parallel>], iteration_bounds = array<i64: 2>, scalar_prefetch = 0 : i64, scratch_operands = 0 : i64, tpu.core_type = #tpu.core_type<tc>, window_params = [{transform_indices = @transform_0, window_bounds = array<i64: 8, 32>}, {transform_indices = @transform_1, window_bounds = array<i64: 8, 8, 32>}, {transform_indices = @transform_2, window_bounds = array<i64: 8, 8>}, {pipeline_mode = #tpu.pipeline_mode<synchronous>, transform_indices = @transform_3, window_bounds = array<i64: 32, 80>}, {pipeline_mode = #tpu.pipeline_mode<synchronous>, transform_indices = @transform_4, window_bounds = array<i64: 64, 80>}, {pipeline_mode = #tpu.pipeline_mode<synchronous>, transform_indices = @transform_5, window_bounds = array<i64: 1, 80>}, {pipeline_mode = #tpu.pipeline_mode<synchronous>, transform_indices = @transform_6, window_bounds = array<i64: 80, 40>}, {pipeline_mode = #tpu.pipeline_mode<synchronous>, transform_indices = @transform_7, window_bounds = array<i64: 1, 40>}, {pipeline_mode = #tpu.pipeline_mode<synchronous>, transform_indices = @transform_8, window_bounds = array<i64: 1, 40>}, {pipeline_mode = #tpu.pipeline_mode<synchronous>, transform_indices = @transform_9, window_bounds = array<i64: 1, 1>}, {transform_indices = @transform_10, window_bounds = array<i64: 8, 32>}]} {
    %c0 = arith.constant 0 : index
    %c0_0 = arith.constant 0 : index
    %0 = vector.load %arg1[%c0, %c0_0] : memref<8x32xf32, #tpu.memory_space<vmem>>, vector<8x32xf32>
    %c0_1 = arith.constant 0 : index
    %c0_2 = arith.constant 0 : index
    %c0_3 = arith.constant 0 : index
    %1 = vector.load %arg2[%c0_1, %c0_2, %c0_3] : memref<8x8x32xf32, #tpu.memory_space<vmem>>, vector<8x8x32xf32>
    %c0_4 = arith.constant 0 : index
    %c0_5 = arith.constant 0 : index
    %2 = vector.load %arg3[%c0_4, %c0_5] : memref<8x8xf32, #tpu.memory_space<vmem>>, vector<8x8xf32>
    %3 = vector.shape_cast %0 : vector<8x32xf32> to vector<8x1x32xf32>
    %4 = vector.broadcast %3 : vector<8x1x32xf32> to vector<8x8x32xf32>
    %5 = arith.mulf %4, %1 : vector<8x8x32xf32>
    %6 = vector.shape_cast %1 : vector<8x8x32xf32> to vector<64x32xf32>
    %7 = vector.shape_cast %5 : vector<8x8x32xf32> to vector<64x32xf32>
    %8 = tpu.concatenate %6, %7 in 1 : vector<64x32xf32>, vector<64x32xf32> -> vector<64x64xf32>
    %c0_6 = arith.constant 0 : index
    %c0_7 = arith.constant 0 : index
    %9 = vector.load %arg4[%c0_6, %c0_7] : memref<32x80xf32, #tpu.memory_space<vmem>>, vector<32x80xf32>
    %cst = arith.constant dense<0.000000e+00> : vector<8x80xf32>
    %10 = tpu.matmul %0, %9, %cst {dimension_numbers = #tpu.dot_dimension_numbers<[1], [0], [0], [1], [0, 0, 1, 1], [], []>} : vector<8x32xf32>, vector<32x80xf32>, vector<8x80xf32> -> vector<8x80xf32>
    %c0_8 = arith.constant 0 : index
    %c0_9 = arith.constant 0 : index
    %11 = vector.load %arg6[%c0_8, %c0_9] : memref<1x80xf32, #tpu.memory_space<vmem>>, vector<1x80xf32>
    %12 = vector.broadcast %11 : vector<1x80xf32> to vector<8x80xf32>
    %13 = arith.addf %10, %12 : vector<8x80xf32>
    %c0_10 = arith.constant 0 : index
    %c0_11 = arith.constant 0 : index
    %14 = vector.load %arg5[%c0_10, %c0_11] : memref<64x80xf32, #tpu.memory_space<vmem>>, vector<64x80xf32>
    %cst_12 = arith.constant dense<0.000000e+00> : vector<64x80xf32>
    %15 = tpu.matmul %8, %14, %cst_12 {dimension_numbers = #tpu.dot_dimension_numbers<[1], [0], [0], [1], [0, 0, 1, 1], [], []>} : vector<64x64xf32>, vector<64x80xf32>, vector<64x80xf32> -> vector<64x80xf32>
    %16 = vector.shape_cast %15 : vector<64x80xf32> to vector<8x8x80xf32>
    %17 = vector.shape_cast %13 : vector<8x80xf32> to vector<8x1x80xf32>
    %18 = vector.broadcast %17 : vector<8x1x80xf32> to vector<8x8x80xf32>
    %19 = arith.addf %16, %18 : vector<8x8x80xf32>
    %cst_13 = arith.constant 5.000000e-01 : f32
    %20 = vector.broadcast %cst_13 : f32 to vector<8x8x80xf32>
    %21 = arith.mulf %20, %19 : vector<8x8x80xf32>
    %22 = math.tanh %21 : vector<8x8x80xf32>
    %cst_14 = arith.constant 5.000000e-01 : f32
    %23 = vector.broadcast %cst_14 : f32 to vector<8x8x80xf32>
    %24 = arith.mulf %23, %22 : vector<8x8x80xf32>
    %cst_15 = arith.constant 5.000000e-01 : f32
    %25 = vector.broadcast %cst_15 : f32 to vector<8x8x80xf32>
    %26 = arith.addf %24, %25 : vector<8x8x80xf32>
    %27 = vector.shape_cast %26 : vector<8x8x80xf32> to vector<64x80xf32>
    %c0_16 = arith.constant 0 : index
    %c0_17 = arith.constant 0 : index
    %28 = vector.load %arg7[%c0_16, %c0_17] : memref<80x40xf32, #tpu.memory_space<vmem>>, vector<80x40xf32>
    %cst_18 = arith.constant dense<0.000000e+00> : vector<64x40xf32>
    %29 = tpu.matmul %27, %28, %cst_18 {dimension_numbers = #tpu.dot_dimension_numbers<[1], [0], [0], [1], [0, 0, 1, 1], [], []>} : vector<64x80xf32>, vector<80x40xf32>, vector<64x40xf32> -> vector<64x40xf32>
    %30 = vector.shape_cast %29 : vector<64x40xf32> to vector<8x8x40xf32>
    %c0_19 = arith.constant 0 : index
    %c0_20 = arith.constant 0 : index
    %31 = vector.load %arg8[%c0_19, %c0_20] : memref<1x40xf32, #tpu.memory_space<vmem>>, vector<1x40xf32>
    %32 = vector.shape_cast %31 : vector<1x40xf32> to vector<1x1x40xf32>
    %33 = vector.broadcast %32 : vector<1x1x40xf32> to vector<8x8x40xf32>
    %34 = arith.addf %30, %33 : vector<8x8x40xf32>
    %cst_21 = arith.constant 5.000000e-01 : f32
    %35 = vector.broadcast %cst_21 : f32 to vector<8x8x40xf32>
    %36 = arith.mulf %35, %34 : vector<8x8x40xf32>
    %37 = math.tanh %36 : vector<8x8x40xf32>
    %cst_22 = arith.constant 5.000000e-01 : f32
    %38 = vector.broadcast %cst_22 : f32 to vector<8x8x40xf32>
    %39 = arith.mulf %38, %37 : vector<8x8x40xf32>
    %cst_23 = arith.constant 5.000000e-01 : f32
    %40 = vector.broadcast %cst_23 : f32 to vector<8x8x40xf32>
    %41 = arith.addf %39, %40 : vector<8x8x40xf32>
    %c0_24 = arith.constant 0 : index
    %c0_25 = arith.constant 0 : index
    %42 = vector.load %arg9[%c0_24, %c0_25] : memref<1x40xf32, #tpu.memory_space<vmem>>, vector<1x40xf32>
    %43 = vector.shape_cast %42 : vector<1x40xf32> to vector<1x1x40xf32>
    %44 = vector.broadcast %43 : vector<1x1x40xf32> to vector<8x8x40xf32>
    %45 = arith.mulf %41, %44 : vector<8x8x40xf32>
    %cst_26 = arith.constant dense<0.000000e+00> : vector<8x8xf32>
    %46 = vector.multi_reduction <add>, %45, %cst_26 [2] : vector<8x8x40xf32> to vector<8x8xf32>
    %c0_27 = arith.constant 0 : index
    %c0_28 = arith.constant 0 : index
    %47 = vector.load %arg10[%c0_27, %c0_28] : memref<1x1xf32, #tpu.memory_space<vmem>>, vector<1x1xf32>
    %48 = vector.broadcast %47 : vector<1x1xf32> to vector<8x8xf32>
    %49 = arith.addf %46, %48 : vector<8x8xf32>
    %cst_29 = arith.constant 0.000000e+00 : f32
    %50 = vector.broadcast %cst_29 : f32 to vector<8x8xf32>
    %51 = arith.cmpf one, %2, %50 : vector<8x8xf32>
    %cst_30 = arith.constant -4.2949673E+9 : f32
    %52 = vector.broadcast %cst_30 : f32 to vector<8x8xf32>
    %53 = arith.select %51, %49, %52 : vector<8x8xi1>, vector<8x8xf32>
    %cst_31 = arith.constant dense<0xFF800000> : vector<8xf32>
    %54 = vector.multi_reduction <maximumf>, %53, %cst_31 [1] : vector<8x8xf32> to vector<8xf32>
    %55 = vector.shape_cast %54 : vector<8xf32> to vector<8x1xf32>
    %56 = vector.broadcast %55 : vector<8x1xf32> to vector<8x8xf32>
    %57 = arith.subf %53, %56 : vector<8x8xf32>
    %58 = math.exp %57 : vector<8x8xf32>
    %cst_32 = arith.constant dense<0.000000e+00> : vector<8xf32>
    %59 = vector.multi_reduction <add>, %58, %cst_32 [1] : vector<8x8xf32> to vector<8xf32>
    %60 = vector.shape_cast %59 : vector<8xf32> to vector<8x1xf32>
    %61 = tpu.reciprocal %60 {approx = true} : vector<8x1xf32> -> vector<8x1xf32>
    %62 = arith.mulf %60, %61 : vector<8x1xf32>
    %cst_33 = arith.constant 2.000000e+00 : f32
    %63 = vector.broadcast %cst_33 : f32 to vector<8x1xf32>
    %64 = arith.subf %63, %62 : vector<8x1xf32>
    %65 = arith.mulf %61, %64 : vector<8x1xf32>
    %66 = vector.broadcast %65 : vector<8x1xf32> to vector<8x8xf32>
    %67 = arith.mulf %58, %66 : vector<8x8xf32>
    %68 = vector.shape_cast %67 : vector<8x8xf32> to vector<8x8x1xf32>
    %69 = vector.broadcast %68 : vector<8x8x1xf32> to vector<8x8x32xf32>
    %70 = arith.mulf %69, %1 : vector<8x8x32xf32>
    %cst_34 = arith.constant dense<0.000000e+00> : vector<8x32xf32>
    %71 = vector.multi_reduction <add>, %70, %cst_34 [1] : vector<8x8x32xf32> to vector<8x32xf32>
    %c0_35 = arith.constant 0 : index
    %c0_36 = arith.constant 0 : index
    %72 = vector.load %arg11[%c0_35, %c0_36] : memref<8x32xf32, #tpu.memory_space<vmem>>, vector<8x32xf32>
    tpu.vector_store %arg11[%c0_35, %c0_36], %71 {strides = array<i32>} : memref<8x32xf32, #tpu.memory_space<vmem>>, vector<8x32xf32>,
    return
  }
  func.func @transform_0(%arg0: i32) -> (i32, i32) {
    %c0_i32 = arith.constant 0 : i32
    %c0_i32_0 = arith.constant 0 : i32
    return %arg0, %c0_i32 : i32, i32
  }
  func.func @transform_1(%arg0: i32) -> (i32, i32, i32) {
    %c0_i32 = arith.constant 0 : i32
    %c0_i32_0 = arith.constant 0 : i32
    %c0_i32_1 = arith.constant 0 : i32
    return %arg0, %c0_i32, %c0_i32_0 : i32, i32, i32
  }
  func.func @transform_2(%arg0: i32) -> (i32, i32) {
    %c0_i32 = arith.constant 0 : i32
    %c0_i32_0 = arith.constant 0 : i32
    return %arg0, %c0_i32 : i32, i32
  }
  func.func @transform_3(%arg0: i32) -> (i32, i32) {
    %c0_i32 = arith.constant 0 : i32
    %c0_i32_0 = arith.constant 0 : i32
    %c0_i32_1 = arith.constant 0 : i32
    return %c0_i32, %c0_i32_0 : i32, i32
  }
  func.func @transform_4(%arg0: i32) -> (i32, i32) {
    %c0_i32 = arith.constant 0 : i32
    %c0_i32_0 = arith.constant 0 : i32
    %c0_i32_1 = arith.constant 0 : i32
    return %c0_i32, %c0_i32_0 : i32, i32
  }
  func.func @transform_5(%arg0: i32) -> (i32, i32) {
    %c0_i32 = arith.constant 0 : i32
    %c0_i32_0 = arith.constant 0 : i32
    %c0_i32_1 = arith.constant 0 : i32
    return %c0_i32, %c0_i32_0 : i32, i32
  }
  func.func @transform_6(%arg0: i32) -> (i32, i32) {
    %c0_i32 = arith.constant 0 : i32
    %c0_i32_0 = arith.constant 0 : i32
    %c0_i32_1 = arith.constant 0 : i32
    return %c0_i32, %c0_i32_0 : i32, i32
  }
  func.func @transform_7(%arg0: i32) -> (i32, i32) {
    %c0_i32 = arith.constant 0 : i32
    %c0_i32_0 = arith.constant 0 : i32
    %c0_i32_1 = arith.constant 0 : i32
    return %c0_i32, %c0_i32_0 : i32, i32
  }
  func.func @transform_8(%arg0: i32) -> (i32, i32) {
    %c0_i32 = arith.constant 0 : i32
    %c0_i32_0 = arith.constant 0 : i32
    %c0_i32_1 = arith.constant 0 : i32
    return %c0_i32, %c0_i32_0 : i32, i32
  }
  func.func @transform_9(%arg0: i32) -> (i32, i32) {
    %c0_i32 = arith.constant 0 : i32
    %c0_i32_0 = arith.constant 0 : i32
    %c0_i32_1 = arith.constant 0 : i32
    return %c0_i32, %c0_i32_0 : i32, i32
  }
  func.func @transform_10(%arg0: i32) -> (i32, i32) {
    %c0_i32 = arith.constant 0 : i32
    %c0_i32_0 = arith.constant 0 : i32
    return %arg0, %c0_i32 : i32, i32
  }
}

</mosaic_0001>

<llo_original>
// kernel: tpu_custom_call.1
$region0: #{tpu_custom_call.1}
  #allocation0 [shape = 'u32[]', space=smem, size = 0x4, offset = 0x4, fixed_abs, tag = 'smem constant byte address 0x4 - core index']
  #allocation1 [shape = 'u32[144,128]{1,0:T(1,128)}', space=vmem, size = 0x12000, scoped, tag = 'internal scratch']
  #allocation2 [shape = 'f32[1,1]{1,0:T(1,128)S(1)}', space=vmem, size = 0x200, scoped, tag = 'scoped memory for tpu_custom_call.1']
  %s0 = inlined_call_operand.hbm [shape: f32[16,32], index: 0, kind: input, shape index: {}]
  %s1 = inlined_call_operand.vmem [shape: f32[16,8,32], index: 1, kind: input, shape index: {}]
  %s2 = inlined_call_operand.vmem [shape: f32[16,8], index: 2, kind: input, shape index: {}]
  %s3 = inlined_call_operand.hbm [shape: f32[32,80], index: 3, kind: input, shape index: {}]
  %s4 = inlined_call_operand.hbm [shape: f32[64,80], index: 4, kind: input, shape index: {}]
  %s5 = inlined_call_operand.vmem [shape: f32[1,80], index: 5, kind: input, shape index: {}]
  %s6 = inlined_call_operand.vmem [shape: f32[80,40], index: 6, kind: input, shape index: {}]
  %s7 = inlined_call_operand.vmem [shape: f32[1,40], index: 7, kind: input, shape index: {}]
  %s8 = inlined_call_operand.vmem [shape: f32[1,40], index: 8, kind: input, shape index: {}]
  %s9 = inlined_call_operand.<no memory space> [shape: f32[1,1], index: 9, kind: input, shape index: {}]
  %s10 = inlined_call_operand.hbm [shape: f32[16,32], index: 10, kind: output, shape index: {}]
  %s11 = sld [smem:[#allocation0]]
  $region85: #{tpu_custom_call.1} parent=0
    _
  %s13 = ssub.s32 1, %s11
  %s14 = scalar_select 0, %s13, %s11
  %v15 = vstv %s9
  %16 = vst [vmem:[#allocation2] sm:$0x1] %v15
  $region1: #{tpu_custom_call.1} parent=0
    #allocation3 [shape = 'u8[8192]{0}', space=vmem, size = 0x2000, scoped, tag = 'input window, operand 0']
    #allocation4 [shape = 's32[2]{0}', space=sflag, size = 0x8, scoped, tag = 'scoped memory for tpu_custom_call.1']
    #allocation5 [shape = 's32[2]{0}', space=sflag, size = 0x8, scoped, tag = 'scoped memory for tpu_custom_call.1']
    #allocation6 [shape = 'u8[16384]{0}', space=vmem, size = 0x4000, scoped, tag = 'input window, operand 3, single buffered']
    #allocation7 [shape = 's32[1]{0}', space=sflag, size = 0x4, scoped, tag = 'scoped memory for tpu_custom_call.1']
    #allocation8 [shape = 'u8[32768]{0}', space=vmem, size = 0x8000, scoped, tag = 'input window, operand 4, single buffered']
    #allocation9 [shape = 'u8[8192]{0}', space=vmem, size = 0x2000, scoped, tag = 'output window, operand 0']
    %17 = vsyncpa [#allocation4], 0
    %s18 = scalar_lea.sflag [#allocation4], 1
    %19 = vsyncpa %s18, 0
    %20 = vsyncpa [#allocation7], 0
    %21 = vsyncpa [#allocation5], 0
    %s22 = scalar_lea.sflag [#allocation5], 1
    %23 = vsyncpa %s22, 0
    loop: start=0, step=1, limit=4
    $region2: #{tpu_custom_call.1} parent=1 // loop_pre_header
      _
    $region3: #{tpu_custom_call.1} parent=1 // loop_header
      %s25 = sphi 0, %s29
      %p26 = scmp.ge.s32.totalorder %s25, 4
      %s35 = sphi 0, %s37
      %s38 = sphi 0, %s35
      %s39 = sphi 0, %s38
      %s55 = sphi 0, %s39
      %s61 = sphi 0, %s63
      %s64 = sphi 0, %s61
      %s65 = sphi 0, %s64
      %s81 = sphi 0, %s65
      %s87 = sphi 0, %s89
      %s90 = sphi 0, %s87
      %s91 = sphi 0, %s90
      %s107 = sphi 0, %s91
      %s111 = sphi 0, %s111
      %s113 = sphi 0, %s111
      %s114 = sphi 0, %s113
      %s128 = sphi 0, %s114
      %s132 = sphi 0, %s132
      %s134 = sphi 0, %s132
      %s135 = sphi 0, %s134
      %s149 = sphi 0, %s135
      %s153 = sphi 0, %s153
      %s155 = sphi 0, %s153
      %s156 = sphi 0, %s155
      %s170 = sphi 0, %s156
      %s174 = sphi 0, %s174
      %s176 = sphi 0, %s174
      %s177 = sphi 0, %s176
      %s191 = sphi 0, %s177
      %s195 = sphi 0, %s195
      %s197 = sphi 0, %s195
      %s198 = sphi 0, %s197
      %s212 = sphi 0, %s198
      %s216 = sphi 0, %s216
      %s218 = sphi 0, %s216
      %s219 = sphi 0, %s218
      %s233 = sphi 0, %s219
      %s237 = sphi 0, %s237
      %s239 = sphi 0, %s237
      %s240 = sphi 0, %s239
      %s254 = sphi 0, %s240
      %s260 = sphi 0, %s262
      %s263 = sphi 0, %s260
      %s264 = sphi 0, %s263
      %s280 = sphi 0, %s264
    $region4: #{tpu_custom_call.1} parent=1 // loop_header_branch
      %28 = sbr.rel (%p26) target = $region8
    $region5: #{tpu_custom_call.1} parent=1 // loop_body
      %s30 = ssub.s32 %s25, 1
      %s31 = ssub.s32 %s25, 2
      %s32 = sadd.s32 %s25, 1
      %s33 = ssub.s32 %s25, %s32
      %p34 = scmp.eq.s32.totalorder %s33, 0
      %s36 = sadd.s32 %s35, 1
      %s37 = scalar_select %p34, %s35, %s36
      %p40 = pneg %p34
      %p41 = scmp.eq.s32.totalorder %s25, 1
      %p42 = por %p40, %p41
      %p43 = scmp.ne.s32.totalorder %s35, %s38
      %p44 = scmp.eq.s32.totalorder %s25, 0
      %p45 = por %p43, %p44
      %p46 = scmp.ne.s32.totalorder %s35, %s38
      %p47 = scmp.eq.s32.totalorder %s30, 1
      %p48 = por %p46, %p47
      %p49 = scmp.ne.s32.totalorder %s38, %s39
      %p50 = scmp.eq.s32.totalorder %s30, 0
      %p51 = por %p49, %p50
      %p52 = scmp.ne.s32.totalorder %s38, %s39
      %p53 = scmp.eq.s32.totalorder %s31, 1
      %p54 = por %p52, %p53
      %p56 = scmp.ne.s32.totalorder %s39, %s55
      %p57 = scmp.eq.s32.totalorder %s31, 0
      %p58 = por %p56, %p57
      %s59 = ssub.s32 %s25, %s32
      %p60 = scmp.eq.s32.totalorder %s59, 0
      %s62 = sadd.s32 %s61, 1
      %s63 = scalar_select %p60, %s61, %s62
      %p66 = pneg %p60
      %p67 = scmp.eq.s32.totalorder %s25, 1
      %p68 = por %p66, %p67
      %p69 = scmp.ne.s32.totalorder %s61, %s64
      %p70 = scmp.eq.s32.totalorder %s25, 0
      %p71 = por %p69, %p70
      %p72 = scmp.ne.s32.totalorder %s61, %s64
      %p73 = scmp.eq.s32.totalorder %s30, 1
      %p74 = por %p72, %p73
      %p75 = scmp.ne.s32.totalorder %s64, %s65
      %p76 = scmp.eq.s32.totalorder %s30, 0
      %p77 = por %p75, %p76
      %p78 = scmp.ne.s32.totalorder %s64, %s65
      %p79 = scmp.eq.s32.totalorder %s31, 1
      %p80 = por %p78, %p79
      %p82 = scmp.ne.s32.totalorder %s65, %s81
      %p83 = scmp.eq.s32.totalorder %s31, 0
      %p84 = por %p82, %p83
      %s85 = ssub.s32 %s25, %s32
      %p86 = scmp.eq.s32.totalorder %s85, 0
      %s88 = sadd.s32 %s87, 1
      %s89 = scalar_select %p86, %s87, %s88
      %p92 = pneg %p86
      %p93 = scmp.eq.s32.totalorder %s25, 1
      %p94 = por %p92, %p93
      %p95 = scmp.ne.s32.totalorder %s87, %s90
      %p96 = scmp.eq.s32.totalorder %s25, 0
      %p97 = por %p95, %p96
      %p98 = scmp.ne.s32.totalorder %s87, %s90
      %p99 = scmp.eq.s32.totalorder %s30, 1
      %p100 = por %p98, %p99
      %p101 = scmp.ne.s32.totalorder %s90, %s91
      %p102 = scmp.eq.s32.totalorder %s30, 0
      %p103 = por %p101, %p102
      %p104 = scmp.ne.s32.totalorder %s90, %s91
      %p105 = scmp.eq.s32.totalorder %s31, 1
      %p106 = por %p104, %p105
      %p108 = scmp.ne.s32.totalorder %s91, %s107
      %p109 = scmp.eq.s32.totalorder %s31, 0
      %p110 = por %p108, %p109
      %s112 = sadd.s32 %s111, 1
      %p115 = scmp.eq.s32.totalorder %s25, 1
      %p116 = scmp.ne.s32.totalorder %s111, %s113
      %p117 = scmp.eq.s32.totalorder %s25, 0
      %p118 = por %p116, %p117
      %p119 = scmp.ne.s32.totalorder %s111, %s113
      %p120 = scmp.eq.s32.totalorder %s30, 1
      %p121 = por %p119, %p120
      %p122 = scmp.ne.s32.totalorder %s113, %s114
      %p123 = scmp.eq.s32.totalorder %s30, 0
      %p124 = por %p122, %p123
      %p125 = scmp.ne.s32.totalorder %s113, %s114
      %p126 = scmp.eq.s32.totalorder %s31, 1
      %p127 = por %p125, %p126
      %p129 = scmp.ne.s32.totalorder %s114, %s128
      %p130 = scmp.eq.s32.totalorder %s31, 0
      %p131 = por %p129, %p130
      %s133 = sadd.s32 %s132, 1
      %p136 = scmp.eq.s32.totalorder %s25, 1
      %p137 = scmp.ne.s32.totalorder %s132, %s134
      %p138 = scmp.eq.s32.totalorder %s25, 0
      %p139 = por %p137, %p138
      %p140 = scmp.ne.s32.totalorder %s132, %s134
      %p141 = scmp.eq.s32.totalorder %s30, 1
      %p142 = por %p140, %p141
      %p143 = scmp.ne.s32.totalorder %s134, %s135
      %p144 = scmp.eq.s32.totalorder %s30, 0
      %p145 = por %p143, %p144
      %p146 = scmp.ne.s32.totalorder %s134, %s135
      %p147 = scmp.eq.s32.totalorder %s31, 1
      %p148 = por %p146, %p147
      %p150 = scmp.ne.s32.totalorder %s135, %s149
      %p151 = scmp.eq.s32.totalorder %s31, 0
      %p152 = por %p150, %p151
      %s154 = sadd.s32 %s153, 1
      %p157 = scmp.eq.s32.totalorder %s25, 1
      %p158 = scmp.ne.s32.totalorder %s153, %s155
      %p159 = scmp.eq.s32.totalorder %s25, 0
      %p160 = por %p158, %p159
      %p161 = scmp.ne.s32.totalorder %s153, %s155
      %p162 = scmp.eq.s32.totalorder %s30, 1
      %p163 = por %p161, %p162
      %p164 = scmp.ne.s32.totalorder %s155, %s156
      %p165 = scmp.eq.s32.totalorder %s30, 0
      %p166 = por %p164, %p165
      %p167 = scmp.ne.s32.totalorder %s155, %s156
      %p168 = scmp.eq.s32.totalorder %s31, 1
      %p169 = por %p167, %p168
      %p171 = scmp.ne.s32.totalorder %s156, %s170
      %p172 = scmp.eq.s32.totalorder %s31, 0
      %p173 = por %p171, %p172
      %s175 = sadd.s32 %s174, 1
      %p178 = scmp.eq.s32.totalorder %s25, 1
      %p179 = scmp.ne.s32.totalorder %s174, %s176
      %p180 = scmp.eq.s32.totalorder %s25, 0
      %p181 = por %p179, %p180
      %p182 = scmp.ne.s32.totalorder %s174, %s176
      %p183 = scmp.eq.s32.totalorder %s30, 1
      %p184 = por %p182, %p183
      %p185 = scmp.ne.s32.totalorder %s176, %s177
      %p186 = scmp.eq.s32.totalorder %s30, 0
      %p187 = por %p185, %p186
      %p188 = scmp.ne.s32.totalorder %s176, %s177
      %p189 = scmp.eq.s32.totalorder %s31, 1
      %p190 = por %p188, %p189
      %p192 = scmp.ne.s32.totalorder %s177, %s191
      %p193 = scmp.eq.s32.totalorder %s31, 0
      %p194 = por %p192, %p193
      %s196 = sadd.s32 %s195, 1
      %p199 = scmp.eq.s32.totalorder %s25, 1
      %p200 = scmp.ne.s32.totalorder %s195, %s197
      %p201 = scmp.eq.s32.totalorder %s25, 0
      %p202 = por %p200, %p201
      %p203 = scmp.ne.s32.totalorder %s195, %s197
      %p204 = scmp.eq.s32.totalorder %s30, 1
      %p205 = por %p203, %p204
      %p206 = scmp.ne.s32.totalorder %s197, %s198
      %p207 = scmp.eq.s32.totalorder %s30, 0
      %p208 = por %p206, %p207
      %p209 = scmp.ne.s32.totalorder %s197, %s198
      %p210 = scmp.eq.s32.totalorder %s31, 1
      %p211 = por %p209, %p210
      %p213 = scmp.ne.s32.totalorder %s198, %s212
      %p214 = scmp.eq.s32.totalorder %s31, 0
      %p215 = por %p213, %p214
      %s217 = sadd.s32 %s216, 1
      %p220 = scmp.eq.s32.totalorder %s25, 1
      %p221 = scmp.ne.s32.totalorder %s216, %s218
      %p222 = scmp.eq.s32.totalorder %s25, 0
      %p223 = por %p221, %p222
      %p224 = scmp.ne.s32.totalorder %s216, %s218
      %p225 = scmp.eq.s32.totalorder %s30, 1
      %p226 = por %p224, %p225
      %p227 = scmp.ne.s32.totalorder %s218, %s219
      %p228 = scmp.eq.s32.totalorder %s30, 0
      %p229 = por %p227, %p228
      %p230 = scmp.ne.s32.totalorder %s218, %s219
      %p231 = scmp.eq.s32.totalorder %s31, 1
      %p232 = por %p230, %p231
      %p234 = scmp.ne.s32.totalorder %s219, %s233
      %p235 = scmp.eq.s32.totalorder %s31, 0
      %p236 = por %p234, %p235
      %s238 = sadd.s32 %s237, 1
      %p241 = scmp.eq.s32.totalorder %s25, 1
      %p242 = scmp.ne.s32.totalorder %s237, %s239
      %p243 = scmp.eq.s32.totalorder %s25, 0
      %p244 = por %p242, %p243
      %p245 = scmp.ne.s32.totalorder %s237, %s239
      %p246 = scmp.eq.s32.totalorder %s30, 1
      %p247 = por %p245, %p246
      %p248 = scmp.ne.s32.totalorder %s239, %s240
      %p249 = scmp.eq.s32.totalorder %s30, 0
      %p250 = por %p248, %p249
      %p251 = scmp.ne.s32.totalorder %s239, %s240
      %p252 = scmp.eq.s32.totalorder %s31, 1
      %p253 = por %p251, %p252
      %p255 = scmp.ne.s32.totalorder %s240, %s254
      %p256 = scmp.eq.s32.totalorder %s31, 0
      %p257 = por %p255, %p256
      %s258 = ssub.s32 %s25, %s32
      %p259 = scmp.eq.s32.totalorder %s258, 0
      %s261 = sadd.s32 %s260, 1
      %s262 = scalar_select %p259, %s260, %s261
      %p265 = pneg %p259
      %p266 = scmp.eq.s32.totalorder %s25, 1
      %p267 = por %p265, %p266
      %p268 = scmp.ne.s32.totalorder %s260, %s263
      %p269 = scmp.eq.s32.totalorder %s25, 0
      %p270 = por %p268, %p269
      %p271 = scmp.ne.s32.totalorder %s260, %s263
      %p272 = scmp.eq.s32.totalorder %s30, 1
      %p273 = por %p271, %p272
      %p274 = scmp.ne.s32.totalorder %s263, %s264
      %p275 = scmp.eq.s32.totalorder %s30, 0
      %p276 = por %p274, %p275
      %p277 = scmp.ne.s32.totalorder %s263, %s264
      %p278 = scmp.eq.s32.totalorder %s31, 1
      %p279 = por %p277, %p278
      %p281 = scmp.ne.s32.totalorder %s264, %s280
      %p282 = scmp.eq.s32.totalorder %s31, 0
      %p283 = por %p281, %p282
      %p284 = scmp.le.s32.totalorder 1, %s25
      %p285 = scmp.lt.s32.totalorder %s25, 3
      %p286 = pnand %p284, %p285
      %p287 = pneg %p286
      // Predicated region
      $region9: #{tpu_custom_call.1} parent=5 // pred_check
        _
      $region10: #{tpu_custom_call.1} parent=5 // pred_check_branch
        %289 = sbr.rel (%p286) target = $region12
      $region11: #{tpu_custom_call.1} parent=5 // pred_region
        %s290 = ssub.s32 %s25, 1
        // Predicated region
        $region13: #{tpu_custom_call.1} parent=11 // pred_check
          %p291 = pneg %p124
        $region14: #{tpu_custom_call.1} parent=11 // pred_check_branch
          %293 = sbr.rel (%p291) target = $region16
        $region15: #{tpu_custom_call.1} parent=11 // pred_region
          %s295 = ssub.s32 512, 512
          %296 = vsyncadd [#allocation7], %s295
          %s297 = sshll.u32 [#allocation6], 4
          %s298 = int_to_ptr.vmem [resolvable:$true] %s297
          %303 = dma.hbm_to_vmem [thread:$0]  %s3, 512, %s298, [#allocation7], 128, 128, 8
        $region16: #{tpu_custom_call.1} parent=11 // pred_fallthru
          _
        // Predicated region
        $region17: #{tpu_custom_call.1} parent=11 // pred_check
          %p304 = pneg %p145
        $region18: #{tpu_custom_call.1} parent=11 // pred_check_branch
          %306 = sbr.rel (%p304) target = $region20
        $region19: #{tpu_custom_call.1} parent=11 // pred_region
          %s308 = ssub.s32 1024, 1024
          %309 = vsyncadd [#allocation7], %s308
          %s310 = sshll.u32 [#allocation8], 4
          %s311 = int_to_ptr.vmem [resolvable:$true] %s310
          %316 = dma.hbm_to_vmem [thread:$0]  %s4, 1024, %s311, [#allocation7], 128, 128, 8
        $region20: #{tpu_custom_call.1} parent=11 // pred_fallthru
          _
        // Predicated region
        $region21: #{tpu_custom_call.1} parent=11 // pred_check
          %p317 = pneg %p166
        $region22: #{tpu_custom_call.1} parent=11 // pred_check_branch
          %319 = sbr.rel (%p317) target = $region24
        $region23: #{tpu_custom_call.1} parent=11 // pred_region
          _
        $region24: #{tpu_custom_call.1} parent=11 // pred_fallthru
          _
        // Predicated region
        $region25: #{tpu_custom_call.1} parent=11 // pred_check
          %p320 = pneg %p187
        $region26: #{tpu_custom_call.1} parent=11 // pred_check_branch
          %322 = sbr.rel (%p320) target = $region28
        $region27: #{tpu_custom_call.1} parent=11 // pred_region
          _
        $region28: #{tpu_custom_call.1} parent=11 // pred_fallthru
          _
        // Predicated region
        $region29: #{tpu_custom_call.1} parent=11 // pred_check
          %p323 = pneg %p208
        $region30: #{tpu_custom_call.1} parent=11 // pred_check_branch
          %325 = sbr.rel (%p323) target = $region32
        $region31: #{tpu_custom_call.1} parent=11 // pred_region
          _
        $region32: #{tpu_custom_call.1} parent=11 // pred_fallthru
          _
        // Predicated region
        $region33: #{tpu_custom_call.1} parent=11 // pred_check
          %p326 = pneg %p229
        $region34: #{tpu_custom_call.1} parent=11 // pred_check_branch
          %328 = sbr.rel (%p326) target = $region36
        $region35: #{tpu_custom_call.1} parent=11 // pred_region
          _
        $region36: #{tpu_custom_call.1} parent=11 // pred_fallthru
          _
        // Predicated region
        $region37: #{tpu_custom_call.1} parent=11 // pred_check
          %p329 = pneg %p250
        $region38: #{tpu_custom_call.1} parent=11 // pred_check_branch
          %331 = sbr.rel (%p329) target = $region40
        $region39: #{tpu_custom_call.1} parent=11 // pred_region
          _
        $region40: #{tpu_custom_call.1} parent=11 // pred_fallthru
          _
      $region12: #{tpu_custom_call.1} parent=5 // pred_fallthru
        _
      %p332 = scmp.lt.s32.totalorder %s25, 2
      // Predicated region
      $region41: #{tpu_custom_call.1} parent=5 // pred_check
        %p333 = pneg %p332
      $region42: #{tpu_custom_call.1} parent=5 // pred_check_branch
        %335 = sbr.rel (%p333) target = $region44
      $region43: #{tpu_custom_call.1} parent=5 // pred_region
        // Predicated region
        $region45: #{tpu_custom_call.1} parent=43 // pred_check
          %p336 = pneg %p45
        $region46: #{tpu_custom_call.1} parent=43 // pred_check_branch
          %338 = sbr.rel (%p336) target = $region48
        $region47: #{tpu_custom_call.1} parent=43 // pred_region
          %s339 = sand.u32 %s35, 1
          %s340 = scalar_lea.sflag [#allocation4], %s339
          %s341 = sand.u32 %s35, 1
          %s342 = smul.addr %s341, 8
          %s343 = scalar_lea.vmem [#allocation3], %s342
          %s345 = ssub.s32 128, 128
          %346 = vsyncadd %s340, %s345
          %s347 = smul.addr %s25, 128
          %s348 = scalar_lea.hbm %s0, %s347
          %s350 = sshll.u32 %s343, 4
          %s351 = int_to_ptr.vmem [resolvable:$true] %s350
          %353 = dma.hbm_to_vmem [thread:$0]  %s348, 128, %s351, %s340
        $region48: #{tpu_custom_call.1} parent=43 // pred_fallthru
          _
        // Predicated region
        $region49: #{tpu_custom_call.1} parent=43 // pred_check
          %p354 = pneg %p71
        $region50: #{tpu_custom_call.1} parent=43 // pred_check_branch
          %356 = sbr.rel (%p354) target = $region52
        $region51: #{tpu_custom_call.1} parent=43 // pred_region
          %s357 = smul.u32 8, %s25
          %p358 = scmp.lt.s32.totalorder %s357, 15
          %s359 = scalar_select %p358, %s357, 15
          %s360 = smul.addr %s359, 8
          %s361 = scalar_lea.vmem %s1, %s360
          %s362 = smul.u32 8, %s25
        $region52: #{tpu_custom_call.1} parent=43 // pred_fallthru
          _
        // Predicated region
        $region53: #{tpu_custom_call.1} parent=43 // pred_check
          %p363 = pneg %p97
        $region54: #{tpu_custom_call.1} parent=43 // pred_check_branch
          %365 = sbr.rel (%p363) target = $region56
        $region55: #{tpu_custom_call.1} parent=43 // pred_region
          %p366 = scmp.lt.s32.totalorder %s25, 1
          %s367 = scalar_select %p366, %s25, 1
          %s368 = smul.addr %s367, 8
          %s369 = scalar_lea.vmem %s2, %s368
        $region56: #{tpu_custom_call.1} parent=43 // pred_fallthru
          _
      $region44: #{tpu_custom_call.1} parent=5 // pred_fallthru
        _
      %p370 = scmp.le.s32.totalorder 1, %s25
      %p371 = scmp.lt.s32.totalorder %s25, 3
      %p372 = pnand %p370, %p371
      %p373 = pneg %p372
      // Predicated region
      $region57: #{tpu_custom_call.1} parent=5 // pred_check
        _
      $region58: #{tpu_custom_call.1} parent=5 // pred_check_branch
        %375 = sbr.rel (%p372) target = $region60
      $region59: #{tpu_custom_call.1} parent=5 // pred_region
        %s376 = ssub.s32 %s25, 1
        %s377 = sand.u32 %s38, 1
        %s378 = scalar_lea.sflag [#allocation4], %s377
        %s379 = sand.u32 %s38, 1
        %s380 = smul.addr %s379, 8
        %s381 = scalar_lea.vmem [#allocation3], %s380
        // Predicated region
        $region61: #{tpu_custom_call.1} parent=59 // pred_check
          %p382 = pneg %p51
        $region62: #{tpu_custom_call.1} parent=59 // pred_check_branch
          %384 = sbr.rel (%p382) target = $region64
        $region63: #{tpu_custom_call.1} parent=59 // pred_region
          %385 = dma.done %s378, 128
        $region64: #{tpu_custom_call.1} parent=59 // pred_fallthru
          _
        // Predicated region
        $region65: #{tpu_custom_call.1} parent=59 // pred_check
          %p386 = pneg %p124
        $region66: #{tpu_custom_call.1} parent=59 // pred_check_branch
          %388 = sbr.rel (%p386) target = $region68
        $region67: #{tpu_custom_call.1} parent=59 // pred_region
          %389 = dma.done [#allocation7], 512
        $region68: #{tpu_custom_call.1} parent=59 // pred_fallthru
          _
        // Predicated region
        $region69: #{tpu_custom_call.1} parent=59 // pred_check
          %p390 = pneg %p145
        $region70: #{tpu_custom_call.1} parent=59 // pred_check_branch
          %392 = sbr.rel (%p390) target = $region72
        $region71: #{tpu_custom_call.1} parent=59 // pred_region
          %393 = dma.done [#allocation7], 1024
        $region72: #{tpu_custom_call.1} parent=59 // pred_fallthru
          _
        %s394 = sand.u32 %s38, 1
        %s395 = scalar_lea.sflag [#allocation4], %s394
        %s396 = sand.u32 %s38, 1
        %s397 = smul.addr %s396, 8
        %s398 = scalar_lea.vmem [#allocation3], %s397
        %p399 = pneg %p51
        %p400 = pneg %p48
        %s401 = smul.u32 8, %s30
        %p402 = scmp.lt.s32.totalorder %s401, 15
        %s403 = scalar_select %p402, %s401, 15
        %s404 = smul.addr %s403, 8
        %s405 = scalar_lea.vmem %s1, %s404
        %p406 = pneg %p77
        %p407 = pneg %p74
        %p408 = scmp.lt.s32.totalorder %s30, 1
        %s409 = scalar_select %p408, %s30, 1
        %s410 = smul.addr %s409, 8
        %s411 = scalar_lea.vmem %s2, %s410
        %p412 = pneg %p103
        %p413 = pneg %p100
        %p414 = pneg %p124
        %p415 = pneg %p121
        %p416 = pneg %p145
        %p417 = pneg %p142
        %p418 = pneg %p166
        %p419 = pneg %p163
        %p420 = pneg %p187
        %p421 = pneg %p184
        %p422 = pneg %p208
        %p423 = pneg %p205
        %p424 = pneg %p229
        %p425 = pneg %p226
        %p426 = pneg %p250
        %p427 = pneg %p247
        %p428 = pneg %p276
        %p429 = pneg %p273
        %s430 = sand.u32 %s263, 1
        %s431 = scalar_lea.sflag [#allocation5], %s430
        %s432 = sand.u32 %s263, 1
        %s433 = smul.addr %s432, 8
        %s434 = scalar_lea.vmem [#allocation9], %s433
        %s435 = smul.u32 8, %s30
        %p436 = scmp.lt.s32.totalorder %s435, 15
        %s437 = scalar_select %p436, %s435, 15
        %s438 = smul.addr %s437, 8
        %s439 = scalar_lea.vmem %s1, %s438
        %s440 = smul.u32 8, %s30
        %p441 = scmp.lt.s32.totalorder %s30, 1
        %s442 = scalar_select %p441, %s30, 1
        %s443 = smul.addr %s442, 8
        %s444 = scalar_lea.vmem %s2, %s443
        %v445 = vld [vmem:[%s381] sm:$0xff]
        %v446 = vld [vmem:[%s439] sm:$0xff]
        %v447 = vld [vmem:[%s439 + $0x8] sm:$0xff]
        %v448 = vld [vmem:[%s439 + $0x10] sm:$0xff]
        %v449 = vld [vmem:[%s439 + $0x18] sm:$0xff]
        %v450 = vld [vmem:[%s439 + $0x20] sm:$0xff]
        %v451 = vld [vmem:[%s439 + $0x28] sm:$0xff]
        %v452 = vld [vmem:[%s439 + $0x30] sm:$0xff]
        %v453 = vld [vmem:[%s439 + $0x38] sm:$0xff]
        %v454 = vld [vmem:[%s444] sm:$0xff]
        %v456 = vcombine.high %v445, %v445
        %v458 = vunpack.c.l.s4 1966171168
        %v459 = vunpack.c.0.s8 %v458
        %v460 = vlaneseq
        %v461 = vshrl.u32 %v460, 7
        %v462 = vsub.s32 %v459, %v461
        %v463 = vrot.slane %v445, %v462
        %v465 = vunpack.c.l.s4 1966171168
        %v466 = vunpack.c.0.s8 %v465
        %v467 = vlaneseq
        %v468 = vshrl.u32 %v467, 7
        %v469 = vsub.s32 %v466, %v468
        %v470 = vrot.slane %v456, %v469
        %v471 = vcombine.high %v463, %v463
        %v472 = vcombine.high %v470, %v470
        %v474 = vunpack.c.l.s4 1966171168
        %v475 = vunpack.c.0.s8 %v474
        %v476 = vlaneseq
        %v477 = vshrl.u32 %v476, 7
        %v478 = vsub.s32 %v475, %v477
        %v479 = vrot.slane %v463, %v478
        %v481 = vunpack.c.l.s4 1966171168
        %v482 = vunpack.c.0.s8 %v481
        %v483 = vlaneseq
        %v484 = vshrl.u32 %v483, 7
        %v485 = vsub.s32 %v482, %v484
        %v486 = vrot.slane %v470, %v485
        %v488 = vunpack.c.l.s4 1966171168
        %v489 = vunpack.c.0.s8 %v488
        %v490 = vlaneseq
        %v491 = vshrl.u32 %v490, 7
        %v492 = vsub.s32 %v489, %v491
        %v493 = vrot.slane %v471, %v492
        %v495 = vunpack.c.l.s4 1966171168
        %v496 = vunpack.c.0.s8 %v495
        %v497 = vlaneseq
        %v498 = vshrl.u32 %v497, 7
        %v499 = vsub.s32 %v496, %v498
        %v500 = vrot.slane %v472, %v499
        %v501 = vcombine.high %v479, %v479
        %v502 = vcombine.high %v486, %v486
        %v503 = vcombine.high %v493, %v493
        %v504 = vcombine.high %v500, %v500
        %v505 = vlaneseq
        %v506 = vshrl.u32 %v505, 7
        %v507 = vsub.s32 0, %v506
        %v508 = vrot.slane %v479, %v507
        %v509 = vlaneseq
        %v510 = vshrl.u32 %v509, 7
        %v511 = vsub.s32 0, %v510
        %v512 = vrot.slane %v493, %v511
        %v513 = vlaneseq
        %v514 = vshrl.u32 %v513, 7
        %v515 = vsub.s32 0, %v514
        %v516 = vrot.slane %v501, %v515
        %v517 = vlaneseq
        %v518 = vshrl.u32 %v517, 7
        %v519 = vsub.s32 0, %v518
        %v520 = vrot.slane %v503, %v519
        %v521 = vlaneseq
        %v522 = vshrl.u32 %v521, 7
        %v523 = vsub.s32 0, %v522
        %v524 = vrot.slane %v486, %v523
        %v525 = vlaneseq
        %v526 = vshrl.u32 %v525, 7
        %v527 = vsub.s32 0, %v526
        %v528 = vrot.slane %v500, %v527
        %v529 = vlaneseq
        %v530 = vshrl.u32 %v529, 7
        %v531 = vsub.s32 0, %v530
        %v532 = vrot.slane %v502, %v531
        %v533 = vlaneseq
        %v534 = vshrl.u32 %v533, 7
        %v535 = vsub.s32 0, %v534
        %v536 = vrot.slane %v504, %v535
        %v545 = vmul.f32 %v508, %v446
        %v546 = vmul.f32 %v512, %v447
        %v547 = vmul.f32 %v516, %v448
        %v548 = vmul.f32 %v520, %v449
        %v549 = vmul.f32 %v524, %v450
        %v550 = vmul.f32 %v528, %v451
        %v551 = vmul.f32 %v532, %v452
        %v552 = vmul.f32 %v536, %v453
        %561 = vrot.lane.b32.xlu0 %v545, 32
        %v562 = vpop.permute.xlu0 %561
        %563 = vrot.lane.b32.xlu0 %v546, 32
        %v564 = vpop.permute.xlu0 %563
        %565 = vrot.lane.b32.xlu0 %v547, 32
        %v566 = vpop.permute.xlu0 %565
        %567 = vrot.lane.b32.xlu0 %v548, 32
        %v568 = vpop.permute.xlu0 %567
        %569 = vrot.lane.b32.xlu0 %v549, 32
        %v570 = vpop.permute.xlu0 %569
        %571 = vrot.lane.b32.xlu0 %v550, 32
        %v572 = vpop.permute.xlu0 %571
        %573 = vrot.lane.b32.xlu0 %v551, 32
        %v574 = vpop.permute.xlu0 %573
        %575 = vrot.lane.b32.xlu0 %v552, 32
        %v576 = vpop.permute.xlu0 %575
        %vm585 = vcmask 261120
        %v586 = vsel %vm585, %v446, %v562
        %v587 = vsel %vm585, %v447, %v564
        %v588 = vsel %vm585, %v448, %v566
        %v589 = vsel %vm585, %v449, %v568
        %v590 = vsel %vm585, %v450, %v570
        %v591 = vsel %vm585, %v451, %v572
        %v592 = vsel %vm585, %v452, %v574
        %v593 = vsel %vm585, %v453, %v576
        %v594 = vld [vmem:[#allocation6] sm:$0xff]
        %v595 = vld [vmem:[#allocation6 + $0x8] sm:$0xff]
        %v596 = vld [vmem:[#allocation6 + $0x10] sm:$0xff]
        %v597 = vld [vmem:[#allocation6 + $0x18] sm:$0xff]
        %v598 = vld [vmem:[%s5] sm:$0x1]
        %v600 = vlaneseq
        %v601 = vshrl.u32 %v600, 7
        %v602 = vsub.s32 0, %v601
        %v603 = vrot.slane %v598, %v602
        %v605 = vsel %vm585, %v445, 0
        %607 = vmatprep.subr.mxu0 0.0
        %608 = vmatpush1.msra.mxu0 %v594
        %609 = vmatprep.subr.mxu0 0.0
        %610 = vmatpush1.msra.mxu0 %v595
        %611 = vmatprep.subr.mxu0 0.0
        %612 = vmatpush1.msra.mxu0 %v596
        %613 = vmatprep.subr.mxu0 0.0
        %614 = vmatpush1.msra.mxu0 %v597
        %615 = vmatprep.subr.mxu0 0.0
        %616 = vmatpush1.msra.mxu0 0.0
        %617 = vmatprep.subr.mxu0 0.0
        %618 = vmatpush1.msra.mxu0 0.0
        %619 = vmatprep.subr.mxu0 0.0
        %620 = vmatpush1.msra.mxu0 0.0
        %621 = vmatprep.subr.mxu0 0.0
        %622 = vmatpush1.msra.mxu0 0.0
        %623 = vmatprep.subr.mxu0 0.0
        %624 = vmatpush1.msra.mxu0 0.0
        %625 = vmatprep.subr.mxu0 0.0
        %626 = vmatpush1.msra.mxu0 0.0
        %627 = vmatprep.subr.mxu0 0.0
        %628 = vmatpush1.msra.mxu0 0.0
        %629 = vmatprep.subr.mxu0 0.0
        %630 = vmatpush1.msra.mxu0 0.0
        %631 = vmatprep.subr.mxu0 0.0
        %632 = vmatpush1.msra.mxu0 0.0
        %633 = vmatprep.subr.mxu0 0.0
        %634 = vmatpush1.msra.mxu0 0.0
        %635 = vmatprep.subr.mxu0 0.0
        %636 = vmatpush1.msra.mxu0 0.0
        %637 = vmatprep.subr.mxu0 0.0
        %638 = vmatpush1.msra.mxu0 0.0
        %639 = vmatprep.subr.mxu0 0.0
        %640 = vmatpush1.msra.mxu0 0.0
        %641 = vmatprep.subr.mxu0 0.0
        %642 = vmatpush1.msra.mxu0 0.0
        %643 = vmatprep.subr.mxu0 0.0
        %644 = vmatpush1.msra.mxu0 0.0
        %645 = vmatprep.subr.mxu0 0.0
        %646 = vmatpush1.msra.mxu0 0.0
        %647 = vmatprep.subr.mxu0 0.0
        %648 = vmatpush1.msra.mxu0 0.0
        %649 = vmatprep.subr.mxu0 0.0
        %650 = vmatpush1.msra.mxu0 0.0
        %651 = vmatprep.subr.mxu0 0.0
        %652 = vmatpush1.msra.mxu0 0.0
        %653 = vmatprep.subr.mxu0 0.0
        %654 = vmatpush1.msra.mxu0 0.0
        %655 = vmatprep.subr.mxu0 0.0
        %656 = vmatpush1.msra.mxu0 0.0
        %657 = vmatprep.subr.mxu0 0.0
        %658 = vmatpush1.msra.mxu0 0.0
        %659 = vmatprep.subr.mxu0 0.0
        %660 = vmatpush1.msra.mxu0 0.0
        %661 = vmatprep.subr.mxu0 0.0
        %662 = vmatpush1.msra.mxu0 0.0
        %663 = vmatprep.subr.mxu0 0.0
        %664 = vmatpush1.msra.mxu0 0.0
        %665 = vmatprep.subr.mxu0 0.0
        %666 = vmatpush1.msra.mxu0 0.0
        %667 = vmatprep.subr.mxu0 0.0
        %668 = vmatpush1.msra.mxu0 0.0
        %669 = vmatprep.subr.mxu0 0.0
        %670 = vmatpush1.msra.mxu0 0.0
        %671 = vmatprep.mubr.f32.mxu0 0.0
        %672 = vmatmul.mubr.f32.gmra.mrb[0].mxu0 %v605
        %v673 = vpop.f32.mrb[0].mxu0
        %v674 = vadd.f32 %v603, %v673
        %v675 = vpop.f32.mrb[0].mxu0
        %676 = vdwg.mxu0
        %v677 = vld [vmem:[#allocation8] sm:$0xff]
        %v678 = vld [vmem:[#allocation8 + $0x8] sm:$0xff]
        %v679 = vld [vmem:[#allocation8 + $0x10] sm:$0xff]
        %v680 = vld [vmem:[#allocation8 + $0x18] sm:$0xff]
        %v681 = vld [vmem:[#allocation8 + $0x20] sm:$0xff]
        %v682 = vld [vmem:[#allocation8 + $0x28] sm:$0xff]
        %v683 = vld [vmem:[#allocation8 + $0x30] sm:$0xff]
        %v684 = vld [vmem:[#allocation8 + $0x38] sm:$0xff]
        %vm685 = vcmask 523264
        %v687 = vsel %vm685, %v586, 0
        %v690 = vsel %vm685, %v587, 0
        %v693 = vsel %vm685, %v588, 0
        %v696 = vsel %vm685, %v589, 0
        %v699 = vsel %vm685, %v590, 0
        %v702 = vsel %vm685, %v591, 0
        %v705 = vsel %vm685, %v592, 0
        %v708 = vsel %vm685, %v593, 0
        %710 = vmatprep.subr.mxu0 0.0
        %711 = vmatpush1.msra.mxu0 %v677
        %712 = vmatprep.subr.mxu0 0.0
        %713 = vmatpush1.msra.mxu0 %v678
        %714 = vmatprep.subr.mxu0 0.0
        %715 = vmatpush1.msra.mxu0 %v679
        %716 = vmatprep.subr.mxu0 0.0
        %717 = vmatpush1.msra.mxu0 %v680
        %718 = vmatprep.subr.mxu0 0.0
        %719 = vmatpush1.msra.mxu0 %v681
        %720 = vmatprep.subr.mxu0 0.0
        %721 = vmatpush1.msra.mxu0 %v682
        %722 = vmatprep.subr.mxu0 0.0
        %723 = vmatpush1.msra.mxu0 %v683
        %724 = vmatprep.subr.mxu0 0.0
        %725 = vmatpush1.msra.mxu0 %v684
        %726 = vmatprep.subr.mxu0 0.0
        %727 = vmatpush1.msra.mxu0 0.0
        %728 = vmatprep.subr.mxu0 0.0
        %729 = vmatpush1.msra.mxu0 0.0
        %730 = vmatprep.subr.mxu0 0.0
        %731 = vmatpush1.msra.mxu0 0.0
        %732 = vmatprep.subr.mxu0 0.0
        %733 = vmatpush1.msra.mxu0 0.0
        %734 = vmatprep.subr.mxu0 0.0
        %735 = vmatpush1.msra.mxu0 0.0
        %736 = vmatprep.subr.mxu0 0.0
        %737 = vmatpush1.msra.mxu0 0.0
        %738 = vmatprep.subr.mxu0 0.0
        %739 = vmatpush1.msra.mxu0 0.0
        %740 = vmatprep.subr.mxu0 0.0
        %741 = vmatpush1.msra.mxu0 0.0
        %742 = vmatprep.subr.mxu0 0.0
        %743 = vmatpush1.msra.mxu0 0.0
        %744 = vmatprep.subr.mxu0 0.0
        %745 = vmatpush1.msra.mxu0 0.0
        %746 = vmatprep.subr.mxu0 0.0
        %747 = vmatpush1.msra.mxu0 0.0
        %748 = vmatprep.subr.mxu0 0.0
        %749 = vmatpush1.msra.mxu0 0.0
        %750 = vmatprep.subr.mxu0 0.0
        %751 = vmatpush1.msra.mxu0 0.0
        %752 = vmatprep.subr.mxu0 0.0
        %753 = vmatpush1.msra.mxu0 0.0
        %754 = vmatprep.subr.mxu0 0.0
        %755 = vmatpush1.msra.mxu0 0.0
        %756 = vmatprep.subr.mxu0 0.0
        %757 = vmatpush1.msra.mxu0 0.0
        %758 = vmatprep.subr.mxu0 0.0
        %759 = vmatpush1.msra.mxu0 0.0
        %760 = vmatprep.subr.mxu0 0.0
        %761 = vmatpush1.msra.mxu0 0.0
        %762 = vmatprep.subr.mxu0 0.0
        %763 = vmatpush1.msra.mxu0 0.0
        %764 = vmatprep.subr.mxu0 0.0
        %765 = vmatpush1.msra.mxu0 0.0
        %766 = vmatprep.subr.mxu0 0.0
        %767 = vmatpush1.msra.mxu0 0.0
        %768 = vmatprep.subr.mxu0 0.0
        %769 = vmatpush1.msra.mxu0 0.0
        %770 = vmatprep.subr.mxu0 0.0
        %771 = vmatpush1.msra.mxu0 0.0
        %772 = vmatprep.subr.mxu0 0.0
        %773 = vmatpush1.msra.mxu0 0.0
        %774 = vmatprep.mubr.f32.mxu0 0.0
        %775 = vmatmul.mubr.f32.gmra.mrb[0].mxu0 %v687
        %v776 = vpop.f32.mrb[0].mxu0
        %v777 = vadd.f32 0.0, %v776
        %v778 = vpop.f32.mrb[0].mxu0
        %779 = vmatprep.mubr.f32.mxu0 0.0
        %780 = vmatmul.mubr.f32.gmra.mrb[0].mxu0 %v690
        %v781 = vpop.f32.mrb[0].mxu0
        %v782 = vadd.f32 0.0, %v781
        %v783 = vpop.f32.mrb[0].mxu0
        %784 = vmatprep.mubr.f32.mxu0 0.0
        %785 = vmatmul.mubr.f32.gmra.mrb[0].mxu0 %v693
        %v786 = vpop.f32.mrb[0].mxu0
        %v787 = vadd.f32 0.0, %v786
        %v788 = vpop.f32.mrb[0].mxu0
        %789 = vmatprep.mubr.f32.mxu0 0.0
        %790 = vmatmul.mubr.f32.gmra.mrb[0].mxu0 %v696
        %v791 = vpop.f32.mrb[0].mxu0
        %v792 = vadd.f32 0.0, %v791
        %v793 = vpop.f32.mrb[0].mxu0
        %794 = vmatprep.mubr.f32.mxu0 0.0
        %795 = vmatmul.mubr.f32.gmra.mrb[0].mxu0 %v699
        %v796 = vpop.f32.mrb[0].mxu0
        %v797 = vadd.f32 0.0, %v796
        %v798 = vpop.f32.mrb[0].mxu0
        %799 = vmatprep.mubr.f32.mxu0 0.0
        %800 = vmatmul.mubr.f32.gmra.mrb[0].mxu0 %v702
        %v801 = vpop.f32.mrb[0].mxu0
        %v802 = vadd.f32 0.0, %v801
        %v803 = vpop.f32.mrb[0].mxu0
        %804 = vmatprep.mubr.f32.mxu0 0.0
        %805 = vmatmul.mubr.f32.gmra.mrb[0].mxu0 %v705
        %v806 = vpop.f32.mrb[0].mxu0
        %v807 = vadd.f32 0.0, %v806
        %v808 = vpop.f32.mrb[0].mxu0
        %809 = vmatprep.mubr.f32.mxu0 0.0
        %810 = vmatmul.mubr.f32.gmra.mrb[0].mxu0 %v708
        %v811 = vpop.f32.mrb[0].mxu0
        %v812 = vadd.f32 0.0, %v811
        %v813 = vpop.f32.mrb[0].mxu0
        %814 = vdwg.mxu0
        %v816 = vcombine.high %v674, %v674
        %v818 = vunpack.c.l.s4 1966171168
        %v819 = vunpack.c.0.s8 %v818
        %v820 = vlaneseq
        %v821 = vshrl.u32 %v820, 7
        %v822 = vsub.s32 %v819, %v821
        %v823 = vrot.slane %v674, %v822
        %v825 = vunpack.c.l.s4 1966171168
        %v826 = vunpack.c.0.s8 %v825
        %v827 = vlaneseq
        %v828 = vshrl.u32 %v827, 7
        %v829 = vsub.s32 %v826, %v828
        %v830 = vrot.slane %v816, %v829
        %v831 = vcombine.high %v823, %v823
        %v832 = vcombine.high %v830, %v830
        %v834 = vunpack.c.l.s4 1966171168
        %v835 = vunpack.c.0.s8 %v834
        %v836 = vlaneseq
        %v837 = vshrl.u32 %v836, 7
        %v838 = vsub.s32 %v835, %v837
        %v839 = vrot.slane %v823, %v838
        %v841 = vunpack.c.l.s4 1966171168
        %v842 = vunpack.c.0.s8 %v841
        %v843 = vlaneseq
        %v844 = vshrl.u32 %v843, 7
        %v845 = vsub.s32 %v842, %v844
        %v846 = vrot.slane %v830, %v845
        %v848 = vunpack.c.l.s4 1966171168
        %v849 = vunpack.c.0.s8 %v848
        %v850 = vlaneseq
        %v851 = vshrl.u32 %v850, 7
        %v852 = vsub.s32 %v849, %v851
        %v853 = vrot.slane %v831, %v852
        %v855 = vunpack.c.l.s4 1966171168
        %v856 = vunpack.c.0.s8 %v855
        %v857 = vlaneseq
        %v858 = vshrl.u32 %v857, 7
        %v859 = vsub.s32 %v856, %v858
        %v860 = vrot.slane %v832, %v859
        %v861 = vcombine.high %v839, %v839
        %v862 = vcombine.high %v846, %v846
        %v863 = vcombine.high %v853, %v853
        %v864 = vcombine.high %v860, %v860
        %v865 = vlaneseq
        %v866 = vshrl.u32 %v865, 7
        %v867 = vsub.s32 0, %v866
        %v868 = vrot.slane %v839, %v867
        %v869 = vlaneseq
        %v870 = vshrl.u32 %v869, 7
        %v871 = vsub.s32 0, %v870
        %v872 = vrot.slane %v853, %v871
        %v873 = vlaneseq
        %v874 = vshrl.u32 %v873, 7
        %v875 = vsub.s32 0, %v874
        %v876 = vrot.slane %v861, %v875
        %v877 = vlaneseq
        %v878 = vshrl.u32 %v877, 7
        %v879 = vsub.s32 0, %v878
        %v880 = vrot.slane %v863, %v879
        %v881 = vlaneseq
        %v882 = vshrl.u32 %v881, 7
        %v883 = vsub.s32 0, %v882
        %v884 = vrot.slane %v846, %v883
        %v885 = vlaneseq
        %v886 = vshrl.u32 %v885, 7
        %v887 = vsub.s32 0, %v886
        %v888 = vrot.slane %v860, %v887
        %v889 = vlaneseq
        %v890 = vshrl.u32 %v889, 7
        %v891 = vsub.s32 0, %v890
        %v892 = vrot.slane %v862, %v891
        %v893 = vlaneseq
        %v894 = vshrl.u32 %v893, 7
        %v895 = vsub.s32 0, %v894
        %v896 = vrot.slane %v864, %v895
        %v905 = vadd.f32 %v777, %v868
        %v906 = vadd.f32 %v782, %v872
        %v907 = vadd.f32 %v787, %v876
        %v908 = vadd.f32 %v792, %v880
        %v909 = vadd.f32 %v797, %v884
        %v910 = vadd.f32 %v802, %v888
        %v911 = vadd.f32 %v807, %v892
        %v912 = vadd.f32 %v812, %v896
        %v913 = vmul.f32 %v905, 0.5
        %v914 = vmul.f32 %v906, 0.5
        %v915 = vmul.f32 %v907, 0.5
        %v916 = vmul.f32 %v908, 0.5
        %v917 = vmul.f32 %v909, 0.5
        %v918 = vmul.f32 %v910, 0.5
        %v919 = vmul.f32 %v911, 0.5
        %v920 = vmul.f32 %v912, 0.5
        %v921 = vtanh.pop %v913
        %v922 = vtanh.pop %v914
        %v923 = vtanh.pop %v915
        %v924 = vtanh.pop %v916
        %v925 = vtanh.pop %v917
        %v926 = vtanh.pop %v918
        %v927 = vtanh.pop %v919
        %v928 = vtanh.pop %v920
        %v929 = vmul.f32 %v921, 0.5
        %v930 = vmul.f32 %v922, 0.5
        %v931 = vmul.f32 %v923, 0.5
        %v932 = vmul.f32 %v924, 0.5
        %v933 = vmul.f32 %v925, 0.5
        %v934 = vmul.f32 %v926, 0.5
        %v935 = vmul.f32 %v927, 0.5
        %v936 = vmul.f32 %v928, 0.5
        %v937 = vadd.f32 %v929, 0.5
        %v938 = vadd.f32 %v930, 0.5
        %v939 = vadd.f32 %v931, 0.5
        %v940 = vadd.f32 %v932, 0.5
        %v941 = vadd.f32 %v933, 0.5
        %v942 = vadd.f32 %v934, 0.5
        %v943 = vadd.f32 %v935, 0.5
        %v944 = vadd.f32 %v936, 0.5
        %v945 = vld [vmem:[%s6] sm:$0xff]
        %v946 = vld [vmem:[%s6 + $0x8] sm:$0xff]
        %v947 = vld [vmem:[%s6 + $0x10] sm:$0xff]
        %v948 = vld [vmem:[%s6 + $0x18] sm:$0xff]
        %v949 = vld [vmem:[%s6 + $0x20] sm:$0xff]
        %v950 = vld [vmem:[%s6 + $0x28] sm:$0xff]
        %v951 = vld [vmem:[%s6 + $0x30] sm:$0xff]
        %v952 = vld [vmem:[%s6 + $0x38] sm:$0xff]
        %v953 = vld [vmem:[%s6 + $0x40] sm:$0xff]
        %v954 = vld [vmem:[%s6 + $0x48] sm:$0xff]
        %vm955 = vcmask 654336
        %v957 = vsel %vm955, %v937, 0
        %v960 = vsel %vm955, %v938, 0
        %v963 = vsel %vm955, %v939, 0
        %v966 = vsel %vm955, %v940, 0
        %v969 = vsel %vm955, %v941, 0
        %v972 = vsel %vm955, %v942, 0
        %v975 = vsel %vm955, %v943, 0
        %v978 = vsel %vm955, %v944, 0
        %980 = vmatprep.subr.mxu0 0.0
        %981 = vmatpush1.msra.mxu0 %v945
        %982 = vmatprep.subr.mxu0 0.0
        %983 = vmatpush1.msra.mxu0 %v946
        %984 = vmatprep.subr.mxu0 0.0
        %985 = vmatpush1.msra.mxu0 %v947
        %986 = vmatprep.subr.mxu0 0.0
        %987 = vmatpush1.msra.mxu0 %v948
        %988 = vmatprep.subr.mxu0 0.0
        %989 = vmatpush1.msra.mxu0 %v949
        %990 = vmatprep.subr.mxu0 0.0
        %991 = vmatpush1.msra.mxu0 %v950
        %992 = vmatprep.subr.mxu0 0.0
        %993 = vmatpush1.msra.mxu0 %v951
        %994 = vmatprep.subr.mxu0 0.0
        %995 = vmatpush1.msra.mxu0 %v952
        %996 = vmatprep.subr.mxu0 0.0
        %997 = vmatpush1.msra.mxu0 %v953
        %998 = vmatprep.subr.mxu0 0.0
        %999 = vmatpush1.msra.mxu0 %v954
        %1000 = vmatprep.subr.mxu0 0.0
        %1001 = vmatpush1.msra.mxu0 0.0
        %1002 = vmatprep.subr.mxu0 0.0
        %1003 = vmatpush1.msra.mxu0 0.0
        %1004 = vmatprep.subr.mxu0 0.0
        %1005 = vmatpush1.msra.mxu0 0.0
        %1006 = vmatprep.subr.mxu0 0.0
        %1007 = vmatpush1.msra.mxu0 0.0
        %1008 = vmatprep.subr.mxu0 0.0
        %1009 = vmatpush1.msra.mxu0 0.0
        %1010 = vmatprep.subr.mxu0 0.0
        %1011 = vmatpush1.msra.mxu0 0.0
        %1012 = vmatprep.subr.mxu0 0.0
        %1013 = vmatpush1.msra.mxu0 0.0
        %1014 = vmatprep.subr.mxu0 0.0
        %1015 = vmatpush1.msra.mxu0 0.0
        %1016 = vmatprep.subr.mxu0 0.0
        %1017 = vmatpush1.msra.mxu0 0.0
        %1018 = vmatprep.subr.mxu0 0.0
        %1019 = vmatpush1.msra.mxu0 0.0
        %1020 = vmatprep.subr.mxu0 0.0
        %1021 = vmatpush1.msra.mxu0 0.0
        %1022 = vmatprep.subr.mxu0 0.0
        %1023 = vmatpush1.msra.mxu0 0.0
        %1024 = vmatprep.subr.mxu0 0.0
        %1025 = vmatpush1.msra.mxu0 0.0
        %1026 = vmatprep.subr.mxu0 0.0
        %1027 = vmatpush1.msra.mxu0 0.0
        %1028 = vmatprep.subr.mxu0 0.0
        %1029 = vmatpush1.msra.mxu0 0.0
        %1030 = vmatprep.subr.mxu0 0.0
        %1031 = vmatpush1.msra.mxu0 0.0
        %1032 = vmatprep.subr.mxu0 0.0
        %1033 = vmatpush1.msra.mxu0 0.0
        %1034 = vmatprep.subr.mxu0 0.0
        %1035 = vmatpush1.msra.mxu0 0.0
        %1036 = vmatprep.subr.mxu0 0.0
        %1037 = vmatpush1.msra.mxu0 0.0
        %1038 = vmatprep.subr.mxu0 0.0
        %1039 = vmatpush1.msra.mxu0 0.0
        %1040 = vmatprep.subr.mxu0 0.0
        %1041 = vmatpush1.msra.mxu0 0.0
        %1042 = vmatprep.subr.mxu0 0.0
        %1043 = vmatpush1.msra.mxu0 0.0
        %1044 = vmatprep.mubr.f32.mxu0 0.0
        %1045 = vmatmul.mubr.f32.gmra.mrb[0].mxu0 %v957
        %v1046 = vpop.f32.mrb[0].mxu0
        %v1047 = vadd.f32 0.0, %v1046
        %v1048 = vpop.f32.mrb[0].mxu0
        %1049 = vmatprep.mubr.f32.mxu0 0.0
        %1050 = vmatmul.mubr.f32.gmra.mrb[0].mxu0 %v960
        %v1051 = vpop.f32.mrb[0].mxu0
        %v1052 = vadd.f32 0.0, %v1051
        %v1053 = vpop.f32.mrb[0].mxu0
        %1054 = vmatprep.mubr.f32.mxu0 0.0
        %1055 = vmatmul.mubr.f32.gmra.mrb[0].mxu0 %v963
        %v1056 = vpop.f32.mrb[0].mxu0
        %v1057 = vadd.f32 0.0, %v1056
        %v1058 = vpop.f32.mrb[0].mxu0
        %1059 = vmatprep.mubr.f32.mxu0 0.0
        %1060 = vmatmul.mubr.f32.gmra.mrb[0].mxu0 %v966
        %v1061 = vpop.f32.mrb[0].mxu0
        %v1062 = vadd.f32 0.0, %v1061
        %v1063 = vpop.f32.mrb[0].mxu0
        %1064 = vmatprep.mubr.f32.mxu0 0.0
        %1065 = vmatmul.mubr.f32.gmra.mrb[0].mxu0 %v969
        %v1066 = vpop.f32.mrb[0].mxu0
        %v1067 = vadd.f32 0.0, %v1066
        %v1068 = vpop.f32.mrb[0].mxu0
        %1069 = vmatprep.mubr.f32.mxu0 0.0
        %1070 = vmatmul.mubr.f32.gmra.mrb[0].mxu0 %v972
        %v1071 = vpop.f32.mrb[0].mxu0
        %v1072 = vadd.f32 0.0, %v1071
        %v1073 = vpop.f32.mrb[0].mxu0
        %1074 = vmatprep.mubr.f32.mxu0 0.0
        %1075 = vmatmul.mubr.f32.gmra.mrb[0].mxu0 %v975
        %v1076 = vpop.f32.mrb[0].mxu0
        %v1077 = vadd.f32 0.0, %v1076
        %v1078 = vpop.f32.mrb[0].mxu0
        %1079 = vmatprep.mubr.f32.mxu0 0.0
        %1080 = vmatmul.mubr.f32.gmra.mrb[0].mxu0 %v978
        %v1081 = vpop.f32.mrb[0].mxu0
        %v1082 = vadd.f32 0.0, %v1081
        %v1083 = vpop.f32.mrb[0].mxu0
        %1084 = vdwg.mxu0
        %v1085 = vld [vmem:[%s7] sm:$0x1]
        %v1087 = vlaneseq
        %v1088 = vshrl.u32 %v1087, 7
        %v1089 = vsub.s32 0, %v1088
        %v1090 = vrot.slane %v1085, %v1089
        %v1092 = vadd.f32 %v1047, %v1090
        %v1093 = vadd.f32 %v1052, %v1090
        %v1094 = vadd.f32 %v1057, %v1090
        %v1095 = vadd.f32 %v1062, %v1090
        %v1096 = vadd.f32 %v1067, %v1090
        %v1097 = vadd.f32 %v1072, %v1090
        %v1098 = vadd.f32 %v1077, %v1090
        %v1099 = vadd.f32 %v1082, %v1090
        %v1100 = vmul.f32 %v1092, 0.5
        %v1101 = vmul.f32 %v1093, 0.5
        %v1102 = vmul.f32 %v1094, 0.5
        %v1103 = vmul.f32 %v1095, 0.5
        %v1104 = vmul.f32 %v1096, 0.5
        %v1105 = vmul.f32 %v1097, 0.5
        %v1106 = vmul.f32 %v1098, 0.5
        %v1107 = vmul.f32 %v1099, 0.5
        %v1108 = vtanh.pop %v1100
        %v1109 = vtanh.pop %v1101
        %v1110 = vtanh.pop %v1102
        %v1111 = vtanh.pop %v1103
        %v1112 = vtanh.pop %v1104
        %v1113 = vtanh.pop %v1105
        %v1114 = vtanh.pop %v1106
        %v1115 = vtanh.pop %v1107
        %v1116 = vmul.f32 %v1108, 0.5
        %v1117 = vmul.f32 %v1109, 0.5
        %v1118 = vmul.f32 %v1110, 0.5
        %v1119 = vmul.f32 %v1111, 0.5
        %v1120 = vmul.f32 %v1112, 0.5
        %v1121 = vmul.f32 %v1113, 0.5
        %v1122 = vmul.f32 %v1114, 0.5
        %v1123 = vmul.f32 %v1115, 0.5
        %v1124 = vadd.f32 %v1116, 0.5
        %v1125 = vadd.f32 %v1117, 0.5
        %v1126 = vadd.f32 %v1118, 0.5
        %v1127 = vadd.f32 %v1119, 0.5
        %v1128 = vadd.f32 %v1120, 0.5
        %v1129 = vadd.f32 %v1121, 0.5
        %v1130 = vadd.f32 %v1122, 0.5
        %v1131 = vadd.f32 %v1123, 0.5
        %v1132 = vld [vmem:[%s8] sm:$0x1]
        %v1134 = vlaneseq
        %v1135 = vshrl.u32 %v1134, 7
        %v1136 = vsub.s32 0, %v1135
        %v1137 = vrot.slane %v1132, %v1136
        %v1139 = vmul.f32 %v1124, %v1137
        %v1140 = vmul.f32 %v1125, %v1137
        %v1141 = vmul.f32 %v1126, %v1137
        %v1142 = vmul.f32 %v1127, %v1137
        %v1143 = vmul.f32 %v1128, %v1137
        %v1144 = vmul.f32 %v1129, %v1137
        %v1145 = vmul.f32 %v1130, %v1137
        %v1146 = vmul.f32 %v1131, %v1137
        %vm1147 = vcmask 326656
        %v1148 = vsel %vm1147, %v1139, 0.0
        %1149 = vadd.xlane.f32.xlu0 %v1148
        %v1150 = vpop.xlane.xlu0 %1149
        %v1151 = vsel %vm1147, %v1140, 0.0
        %1152 = vadd.xlane.f32.xlu0 %v1151
        %v1153 = vpop.xlane.xlu0 %1152
        %v1154 = vsel %vm1147, %v1141, 0.0
        %1155 = vadd.xlane.f32.xlu0 %v1154
        %v1156 = vpop.xlane.xlu0 %1155
        %v1157 = vsel %vm1147, %v1142, 0.0
        %1158 = vadd.xlane.f32.xlu0 %v1157
        %v1159 = vpop.xlane.xlu0 %1158
        %v1160 = vsel %vm1147, %v1143, 0.0
        %1161 = vadd.xlane.f32.xlu0 %v1160
        %v1162 = vpop.xlane.xlu0 %1161
        %v1163 = vsel %vm1147, %v1144, 0.0
        %1164 = vadd.xlane.f32.xlu0 %v1163
        %v1165 = vpop.xlane.xlu0 %1164
        %v1166 = vsel %vm1147, %v1145, 0.0
        %1167 = vadd.xlane.f32.xlu0 %v1166
        %v1168 = vpop.xlane.xlu0 %1167
        %v1169 = vsel %vm1147, %v1146, 0.0
        %1170 = vadd.xlane.f32.xlu0 %v1169
        %v1171 = vpop.xlane.xlu0 %1170
        %v1172 = vld [vmem:[#allocation2] sm:$0x1]
        %v1174 = vlaneseq
        %v1175 = vshrl.u32 %v1174, 7
        %v1176 = vsub.s32 0, %v1175
        %v1177 = vrot.slane %v1172, %v1176
        %1178 = vset.pattern.permute.xlu0 0
        %1179 = vperm.xlu0 %1178, %v1177
        %v1180 = vpop.permute.xlu0 %1179
        %v1182 = vadd.f32 %v1150, %v1180
        %v1183 = vadd.f32 %v1153, %v1180
        %v1184 = vadd.f32 %v1156, %v1180
        %v1185 = vadd.f32 %v1159, %v1180
        %v1186 = vadd.f32 %v1162, %v1180
        %v1187 = vadd.f32 %v1165, %v1180
        %v1188 = vadd.f32 %v1168, %v1180
        %v1189 = vadd.f32 %v1171, %v1180
        %vm1190 = vcmp.ne.f32.partialorder %v454, 0.0
        %v1199 = vlaneseq
        %v1200 = vand.u32 %v1199, 127
        %v1201 = vlaneseq
        %v1202 = vshrl.u32 %v1201, 7
        %v1203 = vsub.s32 %v1200, %v1202
        %v1204 = vrot.slane %v1182, %v1203
        %v1205 = vlaneseq
        %v1206 = vshrl.u32 %v1205, 7
        %v1207 = vsub.s32 %v1200, %v1206
        %v1208 = vrot.slane %v1183, %v1207
        %v1209 = vlaneseq
        %v1210 = vshrl.u32 %v1209, 7
        %v1211 = vsub.s32 %v1200, %v1210
        %v1212 = vrot.slane %v1184, %v1211
        %v1213 = vlaneseq
        %v1214 = vshrl.u32 %v1213, 7
        %v1215 = vsub.s32 %v1200, %v1214
        %v1216 = vrot.slane %v1185, %v1215
        %v1217 = vlaneseq
        %v1218 = vshrl.u32 %v1217, 7
        %v1219 = vsub.s32 %v1200, %v1218
        %v1220 = vrot.slane %v1186, %v1219
        %v1221 = vlaneseq
        %v1222 = vshrl.u32 %v1221, 7
        %v1223 = vsub.s32 %v1200, %v1222
        %v1224 = vrot.slane %v1187, %v1223
        %v1225 = vlaneseq
        %v1226 = vshrl.u32 %v1225, 7
        %v1227 = vsub.s32 %v1200, %v1226
        %v1228 = vrot.slane %v1188, %v1227
        %v1229 = vlaneseq
        %v1230 = vshrl.u32 %v1229, 7
        %v1231 = vsub.s32 %v1200, %v1230
        %v1232 = vrot.slane %v1189, %v1231
        %vm1233 = vcmask 1041409
        %v1234 = vsel %vm1233, %v1208, %v1204
        %vm1235 = vcmask 1042434
        %v1236 = vsel %vm1235, %v1212, %v1234
        %vm1237 = vcmask 1043459
        %v1238 = vsel %vm1237, %v1216, %v1236
        %vm1239 = vcmask 1044484
        %v1240 = vsel %vm1239, %v1220, %v1238
        %vm1241 = vcmask 1045509
        %v1242 = vsel %vm1241, %v1224, %v1240
        %vm1243 = vcmask 1046534
        %v1244 = vsel %vm1243, %v1228, %v1242
        %vm1245 = vcmask 1047559
        %v1246 = vsel %vm1245, %v1232, %v1244
        %v1248 = vsel %vm1190, %v1246, -4.2949673e+09
        %vm1249 = vcmask 64512
        %v1250 = vsel %vm1249, %v1248, -inf
        %1251 = vmax.xlane.f32.xlu0 %v1250
        %v1252 = vpop.xlane.xlu0 %1251
        %v1253 = vsub.f32 %v1248, %v1252
        %v1254 = vmul.f32 %v1253, 1.442695
        %v1255 = vpow.pop %v1254
        %v1256 = vsel %vm1249, %v1255, 0.0
        %1257 = vadd.xlane.f32.xlu0 %v1256
        %v1258 = vpop.xlane.xlu0 %1257
        %v1259 = vrcp.pop %v1258
        %v1260 = vmul.f32 %v1258, %v1259
        %v1261 = vsub.f32 2.0, %v1260
        %v1262 = vmul.f32 %v1259, %v1261
        %v1263 = vmul.f32 %v1255, %v1262
        %v1264 = vlaneseq
        %v1265 = vshrl.u32 %v1264, 7
        %v1266 = vsub.s32 0, %v1265
        %v1267 = vrot.slane %v1263, %v1266
        %1269 = vbcast.lane.b32.xlu0 %v1267, 256
        %v1270 = vpop.permute.xlu0 %1269
        %v1271 = vlaneseq
        %v1272 = vshrl.u32 %v1271, 7
        %v1273 = vsub.s32 1, %v1272
        %v1274 = vrot.slane %v1263, %v1273
        %1276 = vbcast.lane.b32.xlu0 %v1274, 256
        %v1277 = vpop.permute.xlu0 %1276
        %v1278 = vlaneseq
        %v1279 = vshrl.u32 %v1278, 7
        %v1280 = vsub.s32 2, %v1279
        %v1281 = vrot.slane %v1263, %v1280
        %1283 = vbcast.lane.b32.xlu0 %v1281, 256
        %v1284 = vpop.permute.xlu0 %1283
        %v1285 = vlaneseq
        %v1286 = vshrl.u32 %v1285, 7
        %v1287 = vsub.s32 3, %v1286
        %v1288 = vrot.slane %v1263, %v1287
        %1290 = vbcast.lane.b32.xlu0 %v1288, 256
        %v1291 = vpop.permute.xlu0 %1290
        %v1292 = vlaneseq
        %v1293 = vshrl.u32 %v1292, 7
        %v1294 = vsub.s32 4, %v1293
        %v1295 = vrot.slane %v1263, %v1294
        %1297 = vbcast.lane.b32.xlu0 %v1295, 256
        %v1298 = vpop.permute.xlu0 %1297
        %v1299 = vlaneseq
        %v1300 = vshrl.u32 %v1299, 7
        %v1301 = vsub.s32 5, %v1300
        %v1302 = vrot.slane %v1263, %v1301
        %1304 = vbcast.lane.b32.xlu0 %v1302, 256
        %v1305 = vpop.permute.xlu0 %1304
        %v1306 = vlaneseq
        %v1307 = vshrl.u32 %v1306, 7
        %v1308 = vsub.s32 6, %v1307
        %v1309 = vrot.slane %v1263, %v1308
        %1311 = vbcast.lane.b32.xlu0 %v1309, 256
        %v1312 = vpop.permute.xlu0 %1311
        %v1313 = vlaneseq
        %v1314 = vshrl.u32 %v1313, 7
        %v1315 = vsub.s32 7, %v1314
        %v1316 = vrot.slane %v1263, %v1315
        %1318 = vbcast.lane.b32.xlu0 %v1316, 256
        %v1319 = vpop.permute.xlu0 %1318
        %v1320 = vmul.f32 %v1270, %v446
        %v1321 = vmul.f32 %v1277, %v447
        %v1322 = vmul.f32 %v1284, %v448
        %v1323 = vmul.f32 %v1291, %v449
        %v1324 = vmul.f32 %v1298, %v450
        %v1325 = vmul.f32 %v1305, %v451
        %v1326 = vmul.f32 %v1312, %v452
        %v1327 = vmul.f32 %v1319, %v453
        %v1328 = vsel %vm585, %v1320, 0.0
        %v1329 = vrot.slane %v1328, 4
        %v1330 = vadd.f32 %v1328, %v1329
        %v1331 = vrot.slane %v1330, 2
        %v1332 = vadd.f32 %v1330, %v1331
        %v1333 = vrot.slane %v1332, 1
        %v1334 = vadd.f32 %v1332, %v1333
        %v1335 = vsel %vm585, %v1321, 0.0
        %v1336 = vrot.slane %v1335, 4
        %v1337 = vadd.f32 %v1335, %v1336
        %v1338 = vrot.slane %v1337, 2
        %v1339 = vadd.f32 %v1337, %v1338
        %v1340 = vrot.slane %v1339, 1
        %v1341 = vadd.f32 %v1339, %v1340
        %v1342 = vsel %vm585, %v1322, 0.0
        %v1343 = vrot.slane %v1342, 4
        %v1344 = vadd.f32 %v1342, %v1343
        %v1345 = vrot.slane %v1344, 2
        %v1346 = vadd.f32 %v1344, %v1345
        %v1347 = vrot.slane %v1346, 1
        %v1348 = vadd.f32 %v1346, %v1347
        %v1349 = vsel %vm585, %v1323, 0.0
        %v1350 = vrot.slane %v1349, 4
        %v1351 = vadd.f32 %v1349, %v1350
        %v1352 = vrot.slane %v1351, 2
        %v1353 = vadd.f32 %v1351, %v1352
        %v1354 = vrot.slane %v1353, 1
        %v1355 = vadd.f32 %v1353, %v1354
        %v1356 = vsel %vm585, %v1324, 0.0
        %v1357 = vrot.slane %v1356, 4
        %v1358 = vadd.f32 %v1356, %v1357
        %v1359 = vrot.slane %v1358, 2
        %v1360 = vadd.f32 %v1358, %v1359
        %v1361 = vrot.slane %v1360, 1
        %v1362 = vadd.f32 %v1360, %v1361
        %v1363 = vsel %vm585, %v1325, 0.0
        %v1364 = vrot.slane %v1363, 4
        %v1365 = vadd.f32 %v1363, %v1364
        %v1366 = vrot.slane %v1365, 2
        %v1367 = vadd.f32 %v1365, %v1366
        %v1368 = vrot.slane %v1367, 1
        %v1369 = vadd.f32 %v1367, %v1368
        %v1370 = vsel %vm585, %v1326, 0.0
        %v1371 = vrot.slane %v1370, 4
        %v1372 = vadd.f32 %v1370, %v1371
        %v1373 = vrot.slane %v1372, 2
        %v1374 = vadd.f32 %v1372, %v1373
        %v1375 = vrot.slane %v1374, 1
        %v1376 = vadd.f32 %v1374, %v1375
        %v1377 = vsel %vm585, %v1327, 0.0
        %v1378 = vrot.slane %v1377, 4
        %v1379 = vadd.f32 %v1377, %v1378
        %v1380 = vrot.slane %v1379, 2
        %v1381 = vadd.f32 %v1379, %v1380
        %v1382 = vrot.slane %v1381, 1
        %v1383 = vadd.f32 %v1381, %v1382
        %v1392 = vsel %vm1233, %v1341, %v1334
        %v1393 = vsel %vm1235, %v1348, %v1392
        %v1394 = vsel %vm1237, %v1355, %v1393
        %v1395 = vsel %vm1239, %v1362, %v1394
        %v1396 = vsel %vm1241, %v1369, %v1395
        %v1397 = vsel %vm1243, %v1376, %v1396
        %v1398 = vsel %vm1245, %v1383, %v1397
        %1400 = vst.msk [vmem:[%s434] sm:$0xff] %vm585, %v1398
        %s1401 = sand.u32 %s263, 1
        %s1402 = scalar_lea.sflag [#allocation5], %s1401
        %s1403 = sand.u32 %s263, 1
        %s1404 = smul.addr %s1403, 8
        %s1405 = scalar_lea.vmem [#allocation9], %s1404
        // Predicated region
        $region73: #{tpu_custom_call.1} parent=59 // pred_check
          %p1406 = pneg %p273
        $region74: #{tpu_custom_call.1} parent=59 // pred_check_branch
          %1408 = sbr.rel (%p1406) target = $region76
        $region75: #{tpu_custom_call.1} parent=59 // pred_region
          %s1410 = ssub.s32 128, 128
          %1411 = vsyncadd %s1402, %s1410
          %s1412 = smul.addr %s30, 128
          %s1413 = scalar_lea.hbm %s10, %s1412
          %s1415 = sshll.u32 %s1405, 4
          %s1416 = int_to_ptr.vmem [resolvable:$true] %s1415
          %1418 = dma.vmem_to_hbm [thread:$0]  %s1416, 128, %s1413, %s1402
        $region76: #{tpu_custom_call.1} parent=59 // pred_fallthru
          _
      $region60: #{tpu_custom_call.1} parent=5 // pred_fallthru
        _
      %p1419 = scmp.le.s32.totalorder 2, %s25
      // Predicated region
      $region77: #{tpu_custom_call.1} parent=5 // pred_check
        %p1420 = pneg %p1419
      $region78: #{tpu_custom_call.1} parent=5 // pred_check_branch
        %1422 = sbr.rel (%p1420) target = $region80
      $region79: #{tpu_custom_call.1} parent=5 // pred_region
        %s1423 = ssub.s32 %s25, 2
        // Predicated region
        $region81: #{tpu_custom_call.1} parent=79 // pred_check
          %p1424 = pneg %p279
        $region82: #{tpu_custom_call.1} parent=79 // pred_check_branch
          %1426 = sbr.rel (%p1424) target = $region84
        $region83: #{tpu_custom_call.1} parent=79 // pred_region
          %s1427 = sand.u32 %s264, 1
          %s1428 = scalar_lea.sflag [#allocation5], %s1427
          %s1429 = sand.u32 %s264, 1
          %s1430 = smul.addr %s1429, 8
          %s1431 = scalar_lea.vmem [#allocation9], %s1430
          %1432 = dma.done %s1428, 128
        $region84: #{tpu_custom_call.1} parent=79 // pred_fallthru
          _
      $region80: #{tpu_custom_call.1} parent=5 // pred_fallthru
        _
    $region6: #{tpu_custom_call.1} parent=1 // loop_footer
      %s29 = sadd.s32 1, %s25
    $region7: #{tpu_custom_call.1} parent=1 // loop_footer_branch
      %24 = sbr.rel target = $region3
    $region8: #{tpu_custom_call.1} parent=1 // loop_exit
      _
    %1433 = vsyncpa [#allocation4], 1
    %s1434 = scalar_lea.sflag [#allocation4], 1
    %1435 = vsyncpa %s1434, 1
    %1436 = vsyncpa [#allocation7], 1
    %1437 = vsyncpa [#allocation5], 1
    %s1438 = scalar_lea.sflag [#allocation5], 1
    %1439 = vsyncpa %s1438, 1

</llo_original>
